<compile_context>
chip_gen: v6e
topology: v6e:2x2x1
jax: 0.10.0
libtpu: 0.0.40
codegen_flags: <defaults>
</compile_context>

<pallas_src>
import functools

import numpy as np
import jax
import jax.numpy as jnp
from jax.experimental import pallas as pl
from jax.experimental.pallas import tpu as pltpu

KSIZE = 3   # kernel_size
PAD = 1     # padding
EPS = 1e-5  # BatchNorm2d eps


def _round_up(x, m):
    return (x + m - 1) // m * m


# --------------------------- fused Pallas kernel ---------------------------

def _fused_kernel(xh_ref, xl_ref, wh_ref, wl_ref, lowmap_ref, mask_ref,
                  gamma_ref, beta_ref, o_ref, *,
                  w_hi, w_lo, span_h, span_l, hi_stride, hw, n_imgs,
                  inv_count):
    """Fused LastOctaveConv + training-mode BatchNorm2d.

    xh_ref:   (3*Ch, BUF_H)  width-shifted padded high input, flat per image
    xl_ref:   (3*Cl, BUF_L)  width-shifted padded low  input, flat per image
    wh_ref:   (3, Co, 3*Ch)  h2h weights, [ky][co][kx*Ch + c]
    wl_ref:   (3, Co, 3*Cl)  l2h weights, [ky][co][kx*Cl + c]
    lowmap_ref: (1, span_h)  high flat pos -> low flat pos (-1 on garbage lanes)
    mask_ref:   (1, span_h)  1.0 on real output lanes, 0.0 on garbage lanes
    gamma_ref, beta_ref: (Co, 1) BN affine
    o_ref:    (N, Co, H*W)   dense NCHW-compatible output
    """
    co = o_ref.shape[1]

    # ---- high-frequency branch: 3 shifted-slab MXU matmuls (K = 3*Ch) ----
    acc_h = jnp.zeros((co, span_h), jnp.float32)
    for ky in range(KSIZE):
        tap = xh_ref[:, ky * w_hi: ky * w_hi + span_h]            # (3*Ch, span_h)
        acc_h += jnp.dot(wh_ref[ky], tap,
                         preferred_element_type=jnp.float32)

    # ---- low-frequency branch at LOW resolution (4x fewer lanes) ----
    acc_l = jnp.zeros((co, span_l), jnp.float32)
    for ky in range(KSIZE):
        tap = xl_ref[:, ky * w_lo: ky * w_lo + span_l]            # (3*Cl, span_l)
        acc_l += jnp.dot(wl_ref[ky], tap,
                         preferred_element_type=jnp.float32)

    # Nearest-2x upsample folded into one 0/1 selection matmul:
    #   upsel[l, o] = 1  iff  low flat position l feeds high flat position o.
    rows = jax.lax.broadcasted_iota(jnp.int32, (span_l, span_h), 0)
    upsel = jnp.where(rows == lowmap_ref[...], 1.0, 0.0).astype(jnp.float32)
    y = acc_h + jnp.dot(acc_l, upsel, preferred_element_type=jnp.float32)

    # ---- BatchNorm2d (training mode, biased var) in ONE pass over y ----
    mask = mask_ref[...]                                          # (1, span_h)
    ym = y * mask
    s1 = jnp.sum(ym, axis=1, keepdims=True)                       # (Co, 1)
    s2 = jnp.sum(ym * y, axis=1, keepdims=True)                   # sum of y^2 (real)
    mean = s1 * inv_count
    var = s2 * inv_count - mean * mean
    a = gamma_ref[...] * jax.lax.rsqrt(var + EPS)                 # (Co, 1)
    b = beta_ref[...] - mean * a
    y = y * a + b

    # ---- store real outputs: contiguous 256-lane run per image ----
    for ni in range(n_imgs):
        o_ref[ni, :, :] = y[:, ni * hi_stride: ni * hi_stride + hw].astype(
            o_ref.dtype)


# ----------------------- wrapper (thin layout plumbing) -----------------------

def _shifted_slab(x, out_w):
    """(N, C, Hs, Ws) -> (3*C, N*Hp*out_w): zero-pad, 3 width-shifted copies.

    Lane index = n*(Hp*out_w) + hp*out_w + w, row index = kx*C + c.
    Only ~3x the raw input bytes (no 9x im2col amplification).
    """
    n, c, _, _ = x.shape
    xp = jnp.pad(x, ((0, 0), (0, 0), (PAD, PAD), (PAD, PAD)))
    slabs = jnp.stack([xp[:, :, :, kx:kx + out_w] for kx in range(KSIZE)],
                      axis=0)                                     # (3, N, C, Hp, out_w)
    return slabs.transpose(0, 2, 1, 3, 4).reshape(KSIZE * c, -1)


def last_octave_cb(x_h, x_l, params):
    """x_h: (N, Ch, H, W), x_l: (N, Cl, H//2, W//2); weights OIHW.

    Returns (N, Co, H, W) float32.
    """
    n, ch, h, w = x_h.shape
    _, cl, hl, wlow = x_l.shape
    w_h2h = params["w_h2h"]                       # (Co, Ch, 3, 3)
    w_l2h = params["w_l2h"]                       # (Co, Cl, 3, 3)
    co = w_h2h.shape[0]

    hp, hlp = h + 2 * PAD, hl + 2 * PAD
    hi_stride = hp * w                            # per-image flat stride (high)
    lo_stride = hlp * wlow                        # per-image flat stride (low)
    span_h = n * hi_stride
    span_l = n * lo_stride
    buf_h = _round_up(span_h + (KSIZE - 1) * w, 128)
    buf_l = _round_up(span_l + (KSIZE - 1) * wlow, 128)

    # Raw inputs, padded + width-shifted only (built once, small).
    xh_flat = _shifted_slab(x_h, w).astype(jnp.float32)
    xh_flat = jnp.pad(xh_flat, ((0, 0), (0, buf_h - span_h)))
    xl_flat = _shifted_slab(x_l, wlow).astype(jnp.float32)
    xl_flat = jnp.pad(xl_flat, ((0, 0), (0, buf_l - span_l)))

    # Weights: (Co, Cin, ky, kx) -> (ky, Co, kx*Cin + c), matching slab rows.
    wh_mat = w_h2h.transpose(2, 0, 3, 1).reshape(KSIZE, co, KSIZE * ch)
    wh_mat = wh_mat.astype(jnp.float32)
    wl_mat = w_l2h.transpose(2, 0, 3, 1).reshape(KSIZE, co, KSIZE * cl)
    wl_mat = wl_mat.astype(jnp.float32)

    # Compile-time constants: lane validity mask + high->low position map.
    lowmap = np.full((1, span_h), -1, np.int32)
    mask = np.zeros((1, span_h), np.float32)
    for ni in range(n):
        for yy in range(h):
            for xx in range(w):
                o = ni * hi_stride + yy * w + xx
                lowmap[0, o] = ni * lo_stride + (yy // 2) * wlow + (xx // 2)
                mask[0, o] = 1.0

    gamma = params["bn_gamma"].reshape(co, 1).astype(jnp.float32)
    beta = params["bn_beta"].reshape(co, 1).astype(jnp.float32)

    kernel = functools.partial(
        _fused_kernel,
        w_hi=w, w_lo=wlow, span_h=span_h, span_l=span_l,
        hi_stride=hi_stride, hw=h * w, n_imgs=n,
        inv_count=1.0 / float(n * h * w))

    n_bytes = 4 * (xh_flat.size + xl_flat.size + wh_mat.size + wl_mat.size
                   + 2 * span_h + 2 * co + n * co * h * w)
    cost = pl.CostEstimate(
        flops=2 * co * (KSIZE * (KSIZE * ch) * span_h
                        + KSIZE * (KSIZE * cl) * span_l
                        + span_l * span_h),
        transcendentals=co,
        bytes_accessed=n_bytes)

    vmem = pl.BlockSpec(memory_space=pltpu.MemorySpace.VMEM)
    out = pl.pallas_call(
        kernel,
        out_shape=jax.ShapeDtypeStruct((n, co, h * w), jnp.float32),
        in_specs=[vmem] * 8,
        out_specs=vmem,
        cost_estimate=cost,
    )(xh_flat, xl_flat, wh_mat, wl_mat,
      jnp.asarray(lowmap), jnp.asarray(mask), gamma, beta)

    # Free reshape (split of a contiguous last dim) - no transpose, no copy.
    return out.reshape(n, co, h, w)


# --------------------------- reference (plain JAX) ---------------------------

def _reference(x_h, x_l, params):
    dn = ("NCHW", "OIHW", "NCHW")
    conv_h = jax.lax.conv_general_dilated(
        x_h, params["w_h2h"], (1, 1), ((PAD, PAD), (PAD, PAD)),
        dimension_numbers=dn)
    conv_l = jax.lax.conv_general_dilated(
        x_l, params["w_l2h"], (1, 1), ((PAD, PAD), (PAD, PAD)),
        dimension_numbers=dn)
    up = jnp.repeat(jnp.repeat(conv_l, 2, axis=2), 2, axis=3)
    y = conv_h + up
    mean = jnp.mean(y, axis=(0, 2, 3), keepdims=True)
    var = jnp.mean(jnp.square(y - mean), axis=(0, 2, 3), keepdims=True)
    g = params["bn_gamma"].reshape(1, -1, 1, 1)
    b = params["bn_beta"].reshape(1, -1, 1, 1)
    return (y - mean) * jax.lax.rsqrt(var + EPS) * g + b


# ----------------------------------- main -----------------------------------

if __name__ == "__main__":
    # LastOCtaveCB(in_channels=8, out_channels=8, kernel_size=(3,3), alpha=0.5)
    in_channels, out_channels, alpha = 8, 8, 0.5
    c_l = int(alpha * in_channels)          # low-frequency channels  -> 4
    c_h = in_channels - c_l                 # high-frequency channels -> 4

    N, H, W = 2, 16, 16                     # X_h spatial; X_l is H//2 x W//2

    key = jax.random.PRNGKey(0)
    k_xh, k_xl, k_wh, k_wl, k_g, k_b = jax.random.split(key, 6)

    x_h = jax.random.normal(k_xh, (N, c_h, H, W), jnp.float32)
    x_l = jax.random.normal(k_xl, (N, c_l, H // 2, W // 2), jnp.float32)

    params = {
        # conv weights in PyTorch OIHW layout
        "w_h2h": jax.random.normal(k_wh, (out_channels, c_h, KSIZE, KSIZE),
                                   jnp.float32) * 0.1,
        "w_l2h": jax.random.normal(k_wl, (out_channels, c_l, KSIZE, KSIZE),
                                   jnp.float32) * 0.1,
        # BatchNorm affine params (perturbed so the affine path is exercised)
        "bn_gamma": 1.0 + 0.1 * jax.random.normal(k_g, (out_channels,),
                                                  jnp.float32),
        "bn_beta": 0.1 * jax.random.normal(k_b, (out_channels,), jnp.float32),
    }

    out = last_octave_cb(x_h, x_l, params)
    out = jax.block_until_ready(out)

    ref = _reference(x_h, x_l, params)
    assert out.shape == (N, out_channels, H, W)
    assert jnp.allclose(out, ref, atol=1e-4, rtol=1e-4), \
        f"max abs err {jnp.max(jnp.abs(out - ref))}"

    print("KERNEL_OK")
</pallas_src>

<mosaic_0001>
module attributes {stable_mosaic.version = 11 : i64} {
  func.func @_fused_kernel(%arg0: memref<12x640xf32, #tpu.memory_space<vmem>>, %arg1: memref<12x256xf32, #tpu.memory_space<vmem>>, %arg2: memref<3x8x12xf32, #tpu.memory_space<vmem>>, %arg3: memref<3x8x12xf32, #tpu.memory_space<vmem>>, %arg4: memref<1x576xi32, #tpu.memory_space<vmem>>, %arg5: memref<1x576xf32, #tpu.memory_space<vmem>>, %arg6: memref<8x1xf32, #tpu.memory_space<vmem>>, %arg7: memref<8x1xf32, #tpu.memory_space<vmem>>, %arg8: memref<2x8x256xf32, #tpu.memory_space<vmem>>) attributes {dimension_semantics = [], scalar_prefetch = 0 : i64, scratch_operands = 0 : i64, tpu.core_type = #tpu.core_type<tc>} {
    %cst = arith.constant 0.000000e+00 : f32
    %0 = vector.broadcast %cst : f32 to vector<8x576xf32>
    %c0 = arith.constant 0 : index
    %c0_0 = arith.constant 0 : index
    %1 = vector.load %arg0[%c0, %c0_0] : memref<12x640xf32, #tpu.memory_space<vmem>>, vector<12x576xf32>
    %c0_1 = arith.constant 0 : index
    %c0_2 = arith.constant 0 : index
    %c0_3 = arith.constant 0 : index
    %2 = vector.load %arg2[%c0_1, %c0_2, %c0_3] : memref<3x8x12xf32, #tpu.memory_space<vmem>>, vector<1x8x12xf32>
    %3 = vector.shape_cast %2 : vector<1x8x12xf32> to vector<8x12xf32>
    %cst_4 = arith.constant dense<0.000000e+00> : vector<8x576xf32>
    %4 = tpu.matmul %3, %1, %cst_4 {dimension_numbers = #tpu.dot_dimension_numbers<[1], [0], [0], [1], [0, 0, 1, 1], [], []>} : vector<8x12xf32>, vector<12x576xf32>, vector<8x576xf32> -> vector<8x576xf32>
    %5 = arith.addf %0, %4 : vector<8x576xf32>
    %c0_5 = arith.constant 0 : index
    %c16 = arith.constant 16 : index
    %6 = vector.load %arg0[%c0_5, %c16] : memref<12x640xf32, #tpu.memory_space<vmem>>, vector<12x576xf32>
    %c1 = arith.constant 1 : index
    %c0_6 = arith.constant 0 : index
    %c0_7 = arith.constant 0 : index
    %7 = vector.load %arg2[%c1, %c0_6, %c0_7] : memref<3x8x12xf32, #tpu.memory_space<vmem>>, vector<1x8x12xf32>
    %8 = vector.shape_cast %7 : vector<1x8x12xf32> to vector<8x12xf32>
    %cst_8 = arith.constant dense<0.000000e+00> : vector<8x576xf32>
    %9 = tpu.matmul %8, %6, %cst_8 {dimension_numbers = #tpu.dot_dimension_numbers<[1], [0], [0], [1], [0, 0, 1, 1], [], []>} : vector<8x12xf32>, vector<12x576xf32>, vector<8x576xf32> -> vector<8x576xf32>
    %10 = arith.addf %5, %9 : vector<8x576xf32>
    %c0_9 = arith.constant 0 : index
    %c32 = arith.constant 32 : index
    %11 = vector.load %arg0[%c0_9, %c32] : memref<12x640xf32, #tpu.memory_space<vmem>>, vector<12x576xf32>
    %c2 = arith.constant 2 : index
    %c0_10 = arith.constant 0 : index
    %c0_11 = arith.constant 0 : index
    %12 = vector.load %arg2[%c2, %c0_10, %c0_11] : memref<3x8x12xf32, #tpu.memory_space<vmem>>, vector<1x8x12xf32>
    %13 = vector.shape_cast %12 : vector<1x8x12xf32> to vector<8x12xf32>
    %cst_12 = arith.constant dense<0.000000e+00> : vector<8x576xf32>
    %14 = tpu.matmul %13, %11, %cst_12 {dimension_numbers = #tpu.dot_dimension_numbers<[1], [0], [0], [1], [0, 0, 1, 1], [], []>} : vector<8x12xf32>, vector<12x576xf32>, vector<8x576xf32> -> vector<8x576xf32>
    %15 = arith.addf %10, %14 : vector<8x576xf32>
    %cst_13 = arith.constant 0.000000e+00 : f32
    %16 = vector.broadcast %cst_13 : f32 to vector<8x160xf32>
    %c0_14 = arith.constant 0 : index
    %c0_15 = arith.constant 0 : index
    %17 = vector.load %arg1[%c0_14, %c0_15] : memref<12x256xf32, #tpu.memory_space<vmem>>, vector<12x160xf32>
    %c0_16 = arith.constant 0 : index
    %c0_17 = arith.constant 0 : index
    %c0_18 = arith.constant 0 : index
    %18 = vector.load %arg3[%c0_16, %c0_17, %c0_18] : memref<3x8x12xf32, #tpu.memory_space<vmem>>, vector<1x8x12xf32>
    %19 = vector.shape_cast %18 : vector<1x8x12xf32> to vector<8x12xf32>
    %cst_19 = arith.constant dense<0.000000e+00> : vector<8x160xf32>
    %20 = tpu.matmul %19, %17, %cst_19 {dimension_numbers = #tpu.dot_dimension_numbers<[1], [0], [0], [1], [0, 0, 1, 1], [], []>} : vector<8x12xf32>, vector<12x160xf32>, vector<8x160xf32> -> vector<8x160xf32>
    %21 = arith.addf %16, %20 : vector<8x160xf32>
    %c0_20 = arith.constant 0 : index
    %c8 = arith.constant 8 : index
    %22 = vector.load %arg1[%c0_20, %c8] : memref<12x256xf32, #tpu.memory_space<vmem>>, vector<12x160xf32>
    %c1_21 = arith.constant 1 : index
    %c0_22 = arith.constant 0 : index
    %c0_23 = arith.constant 0 : index
    %23 = vector.load %arg3[%c1_21, %c0_22, %c0_23] : memref<3x8x12xf32, #tpu.memory_space<vmem>>, vector<1x8x12xf32>
    %24 = vector.shape_cast %23 : vector<1x8x12xf32> to vector<8x12xf32>
    %cst_24 = arith.constant dense<0.000000e+00> : vector<8x160xf32>
    %25 = tpu.matmul %24, %22, %cst_24 {dimension_numbers = #tpu.dot_dimension_numbers<[1], [0], [0], [1], [0, 0, 1, 1], [], []>} : vector<8x12xf32>, vector<12x160xf32>, vector<8x160xf32> -> vector<8x160xf32>
    %26 = arith.addf %21, %25 : vector<8x160xf32>
    %c0_25 = arith.constant 0 : index
    %c16_26 = arith.constant 16 : index
    %27 = vector.load %arg1[%c0_25, %c16_26] : memref<12x256xf32, #tpu.memory_space<vmem>>, vector<12x160xf32>
    %c2_27 = arith.constant 2 : index
    %c0_28 = arith.constant 0 : index
    %c0_29 = arith.constant 0 : index
    %28 = vector.load %arg3[%c2_27, %c0_28, %c0_29] : memref<3x8x12xf32, #tpu.memory_space<vmem>>, vector<1x8x12xf32>
    %29 = vector.shape_cast %28 : vector<1x8x12xf32> to vector<8x12xf32>
    %cst_30 = arith.constant dense<0.000000e+00> : vector<8x160xf32>
    %30 = tpu.matmul %29, %27, %cst_30 {dimension_numbers = #tpu.dot_dimension_numbers<[1], [0], [0], [1], [0, 0, 1, 1], [], []>} : vector<8x12xf32>, vector<12x160xf32>, vector<8x160xf32> -> vector<8x160xf32>
    %31 = arith.addf %26, %30 : vector<8x160xf32>
    %32 = tpu.iota {dimensions = array<i32: 0>} : vector<160x576xi32>
    %c0_31 = arith.constant 0 : index
    %c0_32 = arith.constant 0 : index
    %33 = vector.load %arg4[%c0_31, %c0_32] : memref<1x576xi32, #tpu.memory_space<vmem>>, vector<1x576xi32>
    %34 = vector.broadcast %33 : vector<1x576xi32> to vector<160x576xi32>
    %35 = arith.cmpi eq, %32, %34 : vector<160x576xi32>
    %cst_33 = arith.constant 1.000000e+00 : f32
    %cst_34 = arith.constant 0.000000e+00 : f32
    %36 = vector.broadcast %cst_33 : f32 to vector<160x576xf32>
    %37 = vector.broadcast %cst_34 : f32 to vector<160x576xf32>
    %38 = arith.select %35, %36, %37 : vector<160x576xi1>, vector<160x576xf32>
    %cst_35 = arith.constant dense<0.000000e+00> : vector<8x576xf32>
    %39 = tpu.matmul %31, %38, %cst_35 {dimension_numbers = #tpu.dot_dimension_numbers<[1], [0], [0], [1], [0, 0, 1, 1], [], []>} : vector<8x160xf32>, vector<160x576xf32>, vector<8x576xf32> -> vector<8x576xf32>
    %40 = arith.addf %15, %39 : vector<8x576xf32>
    %c0_36 = arith.constant 0 : index
    %c0_37 = arith.constant 0 : index
    %41 = vector.load %arg5[%c0_36, %c0_37] : memref<1x576xf32, #tpu.memory_space<vmem>>, vector<1x576xf32>
    %42 = vector.broadcast %41 : vector<1x576xf32> to vector<8x576xf32>
    %43 = arith.mulf %40, %42 : vector<8x576xf32>
    %cst_38 = arith.constant dense<0.000000e+00> : vector<8xf32>
    %44 = vector.multi_reduction <add>, %43, %cst_38 [1] : vector<8x576xf32> to vector<8xf32>
    %45 = vector.shape_cast %44 : vector<8xf32> to vector<8x1xf32>
    %46 = arith.mulf %43, %40 : vector<8x576xf32>
    %cst_39 = arith.constant dense<0.000000e+00> : vector<8xf32>
    %47 = vector.multi_reduction <add>, %46, %cst_39 [1] : vector<8x576xf32> to vector<8xf32>
    %48 = vector.shape_cast %47 : vector<8xf32> to vector<8x1xf32>
    %cst_40 = arith.constant 0.001953125 : f32
    %49 = vector.broadcast %cst_40 : f32 to vector<8x1xf32>
    %50 = arith.mulf %45, %49 : vector<8x1xf32>
    %cst_41 = arith.constant 0.001953125 : f32
    %51 = vector.broadcast %cst_41 : f32 to vector<8x1xf32>
    %52 = arith.mulf %48, %51 : vector<8x1xf32>
    %53 = arith.mulf %50, %50 : vector<8x1xf32>
    %54 = arith.subf %52, %53 : vector<8x1xf32>
    %c0_42 = arith.constant 0 : index
    %c0_43 = arith.constant 0 : index
    %55 = vector.load %arg6[%c0_42, %c0_43] : memref<8x1xf32, #tpu.memory_space<vmem>>, vector<8x1xf32>
    %cst_44 = arith.constant 9.99999974E-6 : f32
    %56 = vector.broadcast %cst_44 : f32 to vector<8x1xf32>
    %57 = arith.addf %54, %56 : vector<8x1xf32>
    %58 = math.rsqrt %57 : vector<8x1xf32>
    %59 = arith.mulf %55, %58 : vector<8x1xf32>
    %c0_45 = arith.constant 0 : index
    %c0_46 = arith.constant 0 : index
    %60 = vector.load %arg7[%c0_45, %c0_46] : memref<8x1xf32, #tpu.memory_space<vmem>>, vector<8x1xf32>
    %61 = arith.mulf %50, %59 : vector<8x1xf32>
    %62 = arith.subf %60, %61 : vector<8x1xf32>
    %63 = vector.broadcast %59 : vector<8x1xf32> to vector<8x576xf32>
    %64 = arith.mulf %40, %63 : vector<8x576xf32>
    %65 = vector.broadcast %62 : vector<8x1xf32> to vector<8x576xf32>
    %66 = arith.addf %64, %65 : vector<8x576xf32>
    %67 = vector.extract_strided_slice %66 {offsets = [0, 0], sizes = [8, 256], strides = [1, 1]} : vector<8x576xf32> to vector<8x256xf32>
    %c0_47 = arith.constant 0 : index
    %c0_48 = arith.constant 0 : index
    %c0_49 = arith.constant 0 : index
    %68 = vector.load %arg8[%c0_47, %c0_48, %c0_49] : memref<2x8x256xf32, #tpu.memory_space<vmem>>, vector<1x8x256xf32>
    %69 = vector.shape_cast %68 : vector<1x8x256xf32> to vector<8x256xf32>
    %70 = vector.shape_cast %67 : vector<8x256xf32> to vector<1x8x256xf32>
    tpu.vector_store %arg8[%c0_47, %c0_48, %c0_49], %70 {strides = array<i32>} : memref<2x8x256xf32, #tpu.memory_space<vmem>>, vector<1x8x256xf32>,
    %71 = vector.extract_strided_slice %66 {offsets = [0, 288], sizes = [8, 256], strides = [1, 1]} : vector<8x576xf32> to vector<8x256xf32>
    %c1_50 = arith.constant 1 : index
    %c0_51 = arith.constant 0 : index
    %c0_52 = arith.constant 0 : index
    %72 = vector.load %arg8[%c1_50, %c0_51, %c0_52] : memref<2x8x256xf32, #tpu.memory_space<vmem>>, vector<1x8x256xf32>
    %73 = vector.shape_cast %72 : vector<1x8x256xf32> to vector<8x256xf32>
    %74 = vector.shape_cast %71 : vector<8x256xf32> to vector<1x8x256xf32>
    tpu.vector_store %arg8[%c1_50, %c0_51, %c0_52], %74 {strides = array<i32>} : memref<2x8x256xf32, #tpu.memory_space<vmem>>, vector<1x8x256xf32>,
    return
  }
}

</mosaic_0001>

<llo_original>
// kernel: tpu_custom_call.1
$region0: #{tpu_custom_call.1}
  #allocation0 [shape = 'u32[]', space=smem, size = 0x4, offset = 0x4, fixed_abs, tag = 'smem constant byte address 0x4 - core index']
  #allocation1 [shape = 'u32[144,128]{1,0:T(1,128)}', space=vmem, size = 0x12000, scoped, tag = 'internal scratch']
  %s0 = inlined_call_operand.hbm [shape: f32[12,640], index: 0, kind: input, shape index: {}]
  %s1 = inlined_call_operand.hbm [shape: f32[12,256], index: 1, kind: input, shape index: {}]
  %s2 = inlined_call_operand.hbm [shape: f32[3,8,12], index: 2, kind: input, shape index: {}]
  %s3 = inlined_call_operand.hbm [shape: f32[3,8,12], index: 3, kind: input, shape index: {}]
  %s4 = inlined_call_operand.vmem [shape: s32[1,576], index: 4, kind: input, shape index: {}]
  %s5 = inlined_call_operand.vmem [shape: f32[1,576], index: 5, kind: input, shape index: {}]
  %s6 = inlined_call_operand.vmem [shape: f32[8,1], index: 6, kind: input, shape index: {}]
  %s7 = inlined_call_operand.vmem [shape: f32[8,1], index: 7, kind: input, shape index: {}]
  %s8 = inlined_call_operand.hbm [shape: f32[2,8,256], index: 8, kind: output, shape index: {}]
  %s9 = sld [smem:[#allocation0]]
  $region58: #{tpu_custom_call.1} parent=0
    _
  %s11 = ssub.s32 1, %s9
  %s12 = scalar_select 0, %s11, %s9
  $region1: #{tpu_custom_call.1} parent=0
    #allocation2 [shape = 'u8[40960]{0}', space=vmem, size = 0xa000, scoped, tag = 'input window, operand 0, single buffered']
    #allocation3 [shape = 's32[1]{0}', space=sflag, size = 0x4, scoped, tag = 'scoped memory for tpu_custom_call.1']
    #allocation4 [shape = 's32[1]{0}', space=sflag, size = 0x4, scoped, tag = 'scoped memory for tpu_custom_call.1']
    #allocation5 [shape = 'u8[16384]{0}', space=vmem, size = 0x4000, scoped, tag = 'input window, operand 1, single buffered']
    #allocation6 [shape = 's32[1]{0}', space=sflag, size = 0x4, scoped, tag = 'scoped memory for tpu_custom_call.1']
    #allocation7 [shape = 'u8[12288]{0}', space=vmem, size = 0x3000, scoped, tag = 'input window, operand 2, single buffered']
    #allocation8 [shape = 'u8[12288]{0}', space=vmem, size = 0x3000, scoped, tag = 'input window, operand 3, single buffered']
    #allocation9 [shape = 's32[1]{0}', space=sflag, size = 0x4, scoped, tag = 'scoped memory for tpu_custom_call.1']
    #allocation10 [shape = 'u8[16384]{0}', space=vmem, size = 0x4000, scoped, tag = 'output window, operand 0, single buffered']
    %13 = vsyncpa [#allocation3], 0
    %14 = vsyncpa [#allocation6], 0
    %15 = vsyncpa [#allocation9], 0
    %16 = vsyncpa [#allocation4], 0
    // Predicated region
    $region2: #{tpu_custom_call.1} parent=1 // pred_check
      _
    $region3: #{tpu_custom_call.1} parent=1 // pred_check_branch
      %18 = sbr.rel (0) target = $region5
    $region4: #{tpu_custom_call.1} parent=1 // pred_region
      %s20 = ssub.s32 1280, 1280
      %21 = vsyncadd [#allocation3], %s20
      %s22 = sshll.u32 [#allocation2], 4
      %s23 = int_to_ptr.vmem [resolvable:$true] %s22
      %28 = dma.hbm_to_vmem [thread:$0]  %s0, 1280, %s23, [#allocation3], 640, 640, 40
    $region5: #{tpu_custom_call.1} parent=1 // pred_fallthru
      _
    // Predicated region
    $region6: #{tpu_custom_call.1} parent=1 // pred_check
      _
    $region7: #{tpu_custom_call.1} parent=1 // pred_check_branch
      %30 = sbr.rel (0) target = $region9
    $region8: #{tpu_custom_call.1} parent=1 // pred_region
      %s32 = ssub.s32 512, 512
      %33 = vsyncadd [#allocation6], %s32
      %s34 = sshll.u32 [#allocation5], 4
      %s35 = int_to_ptr.vmem [resolvable:$true] %s34
      %40 = dma.hbm_to_vmem [thread:$0]  %s1, 512, %s35, [#allocation6], 256, 256, 16
    $region9: #{tpu_custom_call.1} parent=1 // pred_fallthru
      _
    // Predicated region
    $region10: #{tpu_custom_call.1} parent=1 // pred_check
      _
    $region11: #{tpu_custom_call.1} parent=1 // pred_check_branch
      %42 = sbr.rel (0) target = $region13
    $region12: #{tpu_custom_call.1} parent=1 // pred_region
      %s44 = ssub.s32 384, 384
      %45 = vsyncadd [#allocation6], %s44
      %s46 = sshll.u32 [#allocation7], 4
      %s47 = int_to_ptr.vmem [resolvable:$true] %s46
      %52 = dma.hbm_to_vmem [thread:$0]  %s2, 384, %s47, [#allocation6], 128, 128, 8
    $region13: #{tpu_custom_call.1} parent=1 // pred_fallthru
      _
    // Predicated region
    $region14: #{tpu_custom_call.1} parent=1 // pred_check
      _
    $region15: #{tpu_custom_call.1} parent=1 // pred_check_branch
      %54 = sbr.rel (0) target = $region17
    $region16: #{tpu_custom_call.1} parent=1 // pred_region
      %s56 = ssub.s32 384, 384
      %57 = vsyncadd [#allocation9], %s56
      %s58 = sshll.u32 [#allocation8], 4
      %s59 = int_to_ptr.vmem [resolvable:$true] %s58
      %64 = dma.hbm_to_vmem [thread:$0]  %s3, 384, %s59, [#allocation9], 128, 128, 8
    $region17: #{tpu_custom_call.1} parent=1 // pred_fallthru
      _
    // Predicated region
    $region18: #{tpu_custom_call.1} parent=1 // pred_check
      _
    $region19: #{tpu_custom_call.1} parent=1 // pred_check_branch
      %66 = sbr.rel (0) target = $region21
    $region20: #{tpu_custom_call.1} parent=1 // pred_region
      _
    $region21: #{tpu_custom_call.1} parent=1 // pred_fallthru
      _
    // Predicated region
    $region22: #{tpu_custom_call.1} parent=1 // pred_check
      _
    $region23: #{tpu_custom_call.1} parent=1 // pred_check_branch
      %68 = sbr.rel (0) target = $region25
    $region24: #{tpu_custom_call.1} parent=1 // pred_region
      _
    $region25: #{tpu_custom_call.1} parent=1 // pred_fallthru
      _
    // Predicated region
    $region26: #{tpu_custom_call.1} parent=1 // pred_check
      _
    $region27: #{tpu_custom_call.1} parent=1 // pred_check_branch
      %70 = sbr.rel (0) target = $region29
    $region28: #{tpu_custom_call.1} parent=1 // pred_region
      _
    $region29: #{tpu_custom_call.1} parent=1 // pred_fallthru
      _
    // Predicated region
    $region30: #{tpu_custom_call.1} parent=1 // pred_check
      _
    $region31: #{tpu_custom_call.1} parent=1 // pred_check_branch
      %72 = sbr.rel (0) target = $region33
    $region32: #{tpu_custom_call.1} parent=1 // pred_region
      _
    $region33: #{tpu_custom_call.1} parent=1 // pred_fallthru
      _
    // Predicated region
    $region34: #{tpu_custom_call.1} parent=1 // pred_check
      _
    $region35: #{tpu_custom_call.1} parent=1 // pred_check_branch
      %74 = sbr.rel (0) target = $region37
    $region36: #{tpu_custom_call.1} parent=1 // pred_region
      %75 = dma.done [#allocation3], 1280
    $region37: #{tpu_custom_call.1} parent=1 // pred_fallthru
      _
    // Predicated region
    $region38: #{tpu_custom_call.1} parent=1 // pred_check
      _
    $region39: #{tpu_custom_call.1} parent=1 // pred_check_branch
      %77 = sbr.rel (0) target = $region41
    $region40: #{tpu_custom_call.1} parent=1 // pred_region
      %78 = dma.done [#allocation6], 512
    $region41: #{tpu_custom_call.1} parent=1 // pred_fallthru
      _
    // Predicated region
    $region42: #{tpu_custom_call.1} parent=1 // pred_check
      _
    $region43: #{tpu_custom_call.1} parent=1 // pred_check_branch
      %80 = sbr.rel (0) target = $region45
    $region44: #{tpu_custom_call.1} parent=1 // pred_region
      %81 = dma.done [#allocation6], 384
    $region45: #{tpu_custom_call.1} parent=1 // pred_fallthru
      _
    // Predicated region
    $region46: #{tpu_custom_call.1} parent=1 // pred_check
      _
    $region47: #{tpu_custom_call.1} parent=1 // pred_check_branch
      %83 = sbr.rel (0) target = $region49
    $region48: #{tpu_custom_call.1} parent=1 // pred_region
      %84 = dma.done [#allocation9], 384
    $region49: #{tpu_custom_call.1} parent=1 // pred_fallthru
      _
    %v85 = vld [vmem:[#allocation2] sm:$0xff]
    %v86 = vld [vmem:[#allocation2 + $0x8] sm:$0xff]
    %v87 = vld [vmem:[#allocation2 + $0x10] sm:$0xff]
    %v88 = vld [vmem:[#allocation2 + $0x18] sm:$0xff]
    %v89 = vld [vmem:[#allocation2 + $0x20] sm:$0xff]
    %v90 = vld [vmem:[#allocation2 + $0x28] sm:$0xf]
    %v91 = vld [vmem:[#allocation2 + $0x30] sm:$0xf]
    %v92 = vld [vmem:[#allocation2 + $0x38] sm:$0xf]
    %v93 = vld [vmem:[#allocation2 + $0x40] sm:$0xf]
    %v94 = vld [vmem:[#allocation2 + $0x48] sm:$0xf]
    %v95 = vld [vmem:[#allocation7] sm:$0xff]
    %s96 = scalar_lea.vmem [#allocation7], 8
    %v97 = vld [vmem:[%s96] sm:$0xff]
    %108 = vrot.lane.b32.xlu0 %v85, 112
    %v109 = vpop.permute.xlu0 %108
    %110 = vrot.lane.b32.xlu0 %v86, 112
    %v111 = vpop.permute.xlu0 %110
    %112 = vrot.lane.b32.xlu0 %v87, 112
    %v113 = vpop.permute.xlu0 %112
    %114 = vrot.lane.b32.xlu0 %v88, 112
    %v115 = vpop.permute.xlu0 %114
    %116 = vrot.lane.b32.xlu0 %v89, 112
    %v117 = vpop.permute.xlu0 %116
    %118 = vrot.lane.b32.xlu0 %v90, 112
    %v119 = vpop.permute.xlu0 %118
    %120 = vrot.lane.b32.xlu0 %v91, 112
    %v121 = vpop.permute.xlu0 %120
    %122 = vrot.lane.b32.xlu0 %v92, 112
    %v123 = vpop.permute.xlu0 %122
    %124 = vrot.lane.b32.xlu0 %v93, 112
    %v125 = vpop.permute.xlu0 %124
    %126 = vrot.lane.b32.xlu0 %v94, 112
    %v127 = vpop.permute.xlu0 %126
    %vm128 = vcmask 916480
    %v129 = vsel %vm128, %v109, %v111
    %v130 = vsel %vm128, %v111, %v113
    %v131 = vsel %vm128, %v113, %v115
    %v132 = vsel %vm128, %v115, %v117
    %v133 = vsel %vm128, %v119, %v121
    %v134 = vsel %vm128, %v121, %v123
    %v135 = vsel %vm128, %v123, %v125
    %v136 = vsel %vm128, %v125, %v127
    %vm142 = vcmask 97280
    %v144 = vsel %vm142, %v97, 0
    %vm146 = vcmask 1043456
    %v147 = vsel %vm146, %v133, 0
    %v149 = vsel %vm146, %v134, 0
    %v151 = vsel %vm146, %v135, 0
    %v153 = vsel %vm146, %v136, 0
    %v155 = vsel %vm146, %v127, 0
    %157 = vmatprep.subr.mxu0 0.0
    %158 = vmatpush1.msra.mxu0 0.0
    %159 = vmatprep.subr.mxu0 0.0
    %160 = vmatpush1.msra.mxu0 0.0
    %161 = vmatprep.subr.mxu0 0.0
    %162 = vmatpush1.msra.mxu0 0.0
    %163 = vmatprep.subr.mxu0 0.0
    %164 = vmatpush1.msra.mxu0 0.0
    %165 = vmatprep.subr.mxu0 0.0
    %166 = vmatpush1.msra.mxu0 0.0
    %167 = vmatprep.subr.mxu0 0.0
    %168 = vmatpush1.msra.mxu0 0.0
    %169 = vmatprep.subr.mxu0 0.0
    %170 = vmatpush1.msra.mxu0 0.0
    %171 = vmatprep.subr.mxu0 0.0
    %172 = vmatpush1.msra.mxu0 0.0
    %173 = vmatprep.subr.mxu0 0.0
    %174 = vmatpush1.msra.mxu0 0.0
    %175 = vmatprep.subr.mxu0 0.0
    %176 = vmatpush1.msra.mxu0 0.0
    %177 = vmatprep.subr.mxu0 0.0
    %178 = vmatpush1.msra.mxu0 0.0
    %179 = vmatprep.subr.mxu0 0.0
    %180 = vmatpush1.msra.mxu0 0.0
    %181 = vmatprep.subr.mxu0 0.0
    %182 = vmatpush1.msra.mxu0 0.0
    %183 = vmatprep.subr.mxu0 0.0
    %184 = vmatpush1.msra.mxu0 0.0
    %185 = vmatprep.subr.mxu0 %v149
    %186 = vmatpush1.msra.mxu0 %v147
    %187 = vmatprep.subr.mxu0 %v130
    %188 = vmatpush1.msra.mxu0 %v129
    %189 = vmatprep.subr.mxu0 0.0
    %190 = vmatpush2.msra.mxu0 0.0
    %191 = vmatprep.subr.mxu0 0.0
    %192 = vmatpush2.msra.mxu0 0.0
    %193 = vmatprep.subr.mxu0 0.0
    %194 = vmatpush2.msra.mxu0 0.0
    %195 = vmatprep.subr.mxu0 0.0
    %196 = vmatpush2.msra.mxu0 0.0
    %197 = vmatprep.subr.mxu0 0.0
    %198 = vmatpush2.msra.mxu0 0.0
    %199 = vmatprep.subr.mxu0 0.0
    %200 = vmatpush2.msra.mxu0 0.0
    %201 = vmatprep.subr.mxu0 0.0
    %202 = vmatpush2.msra.mxu0 0.0
    %203 = vmatprep.subr.mxu0 0.0
    %204 = vmatpush2.msra.mxu0 0.0
    %205 = vmatprep.subr.mxu0 0.0
    %206 = vmatpush2.msra.mxu0 0.0
    %207 = vmatprep.subr.mxu0 0.0
    %208 = vmatpush2.msra.mxu0 0.0
    %209 = vmatprep.subr.mxu0 0.0
    %210 = vmatpush2.msra.mxu0 0.0
    %211 = vmatprep.subr.mxu0 0.0
    %212 = vmatpush2.msra.mxu0 0.0
    %213 = vmatprep.subr.mxu0 0.0
    %214 = vmatpush2.msra.mxu0 0.0
    %215 = vmatprep.subr.mxu0 0.0
    %216 = vmatpush2.msra.mxu0 0.0
    %217 = vmatprep.subr.mxu0 0.0
    %218 = vmatpush2.msra.mxu0 0.0
    %219 = vmatprep.subr.mxu0 0.0
    %220 = vmatpush2.msra.mxu0 0.0
    %221 = vmatprep.mubr.f32.mxu0 0.0
    %222 = vmatmul.mubr.f32.gmra.mxu0 %v144
    %v223 = vpop.f32.mrf.mxu0
    %v224 = vadd.f32 0.0, %v223
    %v225 = vpop.f32.mrf.mxu0
    %v226 = vadd.f32 0.0, %v225
    %227 = vdwg.mxu0
    %228 = vmatprep.subr.mxu0 0.0
    %229 = vmatpush1.msra.mxu0 0.0
    %230 = vmatprep.subr.mxu0 0.0
    %231 = vmatpush1.msra.mxu0 0.0
    %232 = vmatprep.subr.mxu0 0.0
    %233 = vmatpush1.msra.mxu0 0.0
    %234 = vmatprep.subr.mxu0 0.0
    %235 = vmatpush1.msra.mxu0 0.0
    %236 = vmatprep.subr.mxu0 0.0
    %237 = vmatpush1.msra.mxu0 0.0
    %238 = vmatprep.subr.mxu0 0.0
    %239 = vmatpush1.msra.mxu0 0.0
    %240 = vmatprep.subr.mxu0 0.0
    %241 = vmatpush1.msra.mxu0 0.0
    %242 = vmatprep.subr.mxu0 0.0
    %243 = vmatpush1.msra.mxu0 0.0
    %244 = vmatprep.subr.mxu0 0.0
    %245 = vmatpush1.msra.mxu0 0.0
    %246 = vmatprep.subr.mxu0 0.0
    %247 = vmatpush1.msra.mxu0 0.0
    %248 = vmatprep.subr.mxu0 0.0
    %249 = vmatpush1.msra.mxu0 0.0
    %250 = vmatprep.subr.mxu0 0.0
    %251 = vmatpush1.msra.mxu0 0.0
    %252 = vmatprep.subr.mxu0 0.0
    %253 = vmatpush1.msra.mxu0 0.0
    %254 = vmatprep.subr.mxu0 0.0
    %255 = vmatpush1.msra.mxu0 0.0
    %256 = vmatprep.subr.mxu0 %v153
    %257 = vmatpush1.msra.mxu0 %v151
    %258 = vmatprep.subr.mxu0 %v132
    %259 = vmatpush1.msra.mxu0 %v131
    %260 = vmatprep.subr.mxu0 0.0
    %261 = vmatpush2.msra.mxu0 0.0
    %262 = vmatprep.subr.mxu0 0.0
    %263 = vmatpush2.msra.mxu0 0.0
    %264 = vmatprep.subr.mxu0 0.0
    %265 = vmatpush2.msra.mxu0 0.0
    %266 = vmatprep.subr.mxu0 0.0
    %267 = vmatpush2.msra.mxu0 0.0
    %268 = vmatprep.subr.mxu0 0.0
    %269 = vmatpush2.msra.mxu0 0.0
    %270 = vmatprep.subr.mxu0 0.0
    %271 = vmatpush2.msra.mxu0 0.0
    %272 = vmatprep.subr.mxu0 0.0
    %273 = vmatpush2.msra.mxu0 0.0
    %274 = vmatprep.subr.mxu0 0.0
    %275 = vmatpush2.msra.mxu0 0.0
    %276 = vmatprep.subr.mxu0 0.0
    %277 = vmatpush2.msra.mxu0 0.0
    %278 = vmatprep.subr.mxu0 0.0
    %279 = vmatpush2.msra.mxu0 0.0
    %280 = vmatprep.subr.mxu0 0.0
    %281 = vmatpush2.msra.mxu0 0.0
    %282 = vmatprep.subr.mxu0 0.0
    %283 = vmatpush2.msra.mxu0 0.0
    %284 = vmatprep.subr.mxu0 0.0
    %285 = vmatpush2.msra.mxu0 0.0
    %286 = vmatprep.subr.mxu0 0.0
    %287 = vmatpush2.msra.mxu0 0.0
    %288 = vmatprep.subr.mxu0 0.0
    %289 = vmatpush2.msra.mxu0 0.0
    %290 = vmatprep.subr.mxu0 0.0
    %291 = vmatpush2.msra.mxu0 0.0
    %292 = vmatprep.mubr.f32.mxu0 0.0
    %293 = vmatmul.mubr.f32.gmra.mxu0 %v144
    %v294 = vpop.f32.mrf.mxu0
    %v295 = vadd.f32 0.0, %v294
    %v296 = vpop.f32.mrf.mxu0
    %v297 = vadd.f32 0.0, %v296
    %298 = vdwg.mxu0
    %299 = vmatprep.subr.mxu0 0.0
    %300 = vmatpush1.msra.mxu0 0.0
    %301 = vmatprep.subr.mxu0 0.0
    %302 = vmatpush1.msra.mxu0 0.0
    %303 = vmatprep.subr.mxu0 0.0
    %304 = vmatpush1.msra.mxu0 0.0
    %305 = vmatprep.subr.mxu0 0.0
    %306 = vmatpush1.msra.mxu0 0.0
    %307 = vmatprep.subr.mxu0 0.0
    %308 = vmatpush1.msra.mxu0 0.0
    %309 = vmatprep.subr.mxu0 0.0
    %310 = vmatpush1.msra.mxu0 0.0
    %311 = vmatprep.subr.mxu0 0.0
    %312 = vmatpush1.msra.mxu0 0.0
    %313 = vmatprep.subr.mxu0 0.0
    %314 = vmatpush1.msra.mxu0 0.0
    %315 = vmatprep.subr.mxu0 0.0
    %316 = vmatpush1.msra.mxu0 0.0
    %317 = vmatprep.subr.mxu0 0.0
    %318 = vmatpush1.msra.mxu0 0.0
    %319 = vmatprep.subr.mxu0 0.0
    %320 = vmatpush1.msra.mxu0 0.0
    %321 = vmatprep.subr.mxu0 0.0
    %322 = vmatpush1.msra.mxu0 0.0
    %323 = vmatprep.subr.mxu0 0.0
    %324 = vmatpush1.msra.mxu0 0.0
    %325 = vmatprep.subr.mxu0 0.0
    %326 = vmatpush1.msra.mxu0 0.0
    %327 = vmatprep.subr.mxu0 0.0
    %328 = vmatpush1.msra.mxu0 %v155
    %329 = vmatprep.subr.mxu0 0.0
    %330 = vmatpush1.msra.mxu0 %v117
    %331 = vmatprep.subr.mxu0 0.0
    %332 = vmatpush2.msra.mxu0 0.0
    %333 = vmatprep.subr.mxu0 0.0
    %334 = vmatpush2.msra.mxu0 0.0
    %335 = vmatprep.subr.mxu0 0.0
    %336 = vmatpush2.msra.mxu0 0.0
    %337 = vmatprep.subr.mxu0 0.0
    %338 = vmatpush2.msra.mxu0 0.0
    %339 = vmatprep.subr.mxu0 0.0
    %340 = vmatpush2.msra.mxu0 0.0
    %341 = vmatprep.subr.mxu0 0.0
    %342 = vmatpush2.msra.mxu0 0.0
    %343 = vmatprep.subr.mxu0 0.0
    %344 = vmatpush2.msra.mxu0 0.0
    %345 = vmatprep.subr.mxu0 0.0
    %346 = vmatpush2.msra.mxu0 0.0
    %347 = vmatprep.subr.mxu0 0.0
    %348 = vmatpush2.msra.mxu0 0.0
    %349 = vmatprep.subr.mxu0 0.0
    %350 = vmatpush2.msra.mxu0 0.0
    %351 = vmatprep.subr.mxu0 0.0
    %352 = vmatpush2.msra.mxu0 0.0
    %353 = vmatprep.subr.mxu0 0.0
    %354 = vmatpush2.msra.mxu0 0.0
    %355 = vmatprep.subr.mxu0 0.0
    %356 = vmatpush2.msra.mxu0 0.0
    %357 = vmatprep.subr.mxu0 0.0
    %358 = vmatpush2.msra.mxu0 0.0
    %359 = vmatprep.subr.mxu0 0.0
    %360 = vmatpush2.msra.mxu0 0.0
    %361 = vmatprep.subr.mxu0 0.0
    %362 = vmatpush2.msra.mxu0 0.0
    %363 = vmatprep.mubr.f32.mxu0 0.0
    %364 = vmatmul.mubr.f32.gmra.mxu0 %v144
    %v365 = vpop.f32.mrf.mxu0
    %v366 = vadd.f32 0.0, %v365
    %v367 = vpop.f32.mrf.mxu0
    %368 = vdwg.mxu0
    %v370 = vsel %vm142, %v95, 0
    %v372 = vsel %vm146, %v90, 0
    %v374 = vsel %vm146, %v91, 0
    %v376 = vsel %vm146, %v92, 0
    %v378 = vsel %vm146, %v93, 0
    %v380 = vsel %vm146, %v94, 0
    %382 = vmatprep.subr.mxu0 0.0
    %383 = vmatpush1.msra.mxu0 0.0
    %384 = vmatprep.subr.mxu0 0.0
    %385 = vmatpush1.msra.mxu0 0.0
    %386 = vmatprep.subr.mxu0 0.0
    %387 = vmatpush1.msra.mxu0 0.0
    %388 = vmatprep.subr.mxu0 0.0
    %389 = vmatpush1.msra.mxu0 0.0
    %390 = vmatprep.subr.mxu0 0.0
    %391 = vmatpush1.msra.mxu0 0.0
    %392 = vmatprep.subr.mxu0 0.0
    %393 = vmatpush1.msra.mxu0 0.0
    %394 = vmatprep.subr.mxu0 0.0
    %395 = vmatpush1.msra.mxu0 0.0
    %396 = vmatprep.subr.mxu0 0.0
    %397 = vmatpush1.msra.mxu0 0.0
    %398 = vmatprep.subr.mxu0 0.0
    %399 = vmatpush1.msra.mxu0 0.0
    %400 = vmatprep.subr.mxu0 0.0
    %401 = vmatpush1.msra.mxu0 0.0
    %402 = vmatprep.subr.mxu0 0.0
    %403 = vmatpush1.msra.mxu0 0.0
    %404 = vmatprep.subr.mxu0 0.0
    %405 = vmatpush1.msra.mxu0 0.0
    %406 = vmatprep.subr.mxu0 0.0
    %407 = vmatpush1.msra.mxu0 0.0
    %408 = vmatprep.subr.mxu0 0.0
    %409 = vmatpush1.msra.mxu0 0.0
    %410 = vmatprep.subr.mxu0 %v374
    %411 = vmatpush1.msra.mxu0 %v372
    %412 = vmatprep.subr.mxu0 %v86
    %413 = vmatpush1.msra.mxu0 %v85
    %414 = vmatprep.subr.mxu0 0.0
    %415 = vmatpush2.msra.mxu0 0.0
    %416 = vmatprep.subr.mxu0 0.0
    %417 = vmatpush2.msra.mxu0 0.0
    %418 = vmatprep.subr.mxu0 0.0
    %419 = vmatpush2.msra.mxu0 0.0
    %420 = vmatprep.subr.mxu0 0.0
    %421 = vmatpush2.msra.mxu0 0.0
    %422 = vmatprep.subr.mxu0 0.0
    %423 = vmatpush2.msra.mxu0 0.0
    %424 = vmatprep.subr.mxu0 0.0
    %425 = vmatpush2.msra.mxu0 0.0
    %426 = vmatprep.subr.mxu0 0.0
    %427 = vmatpush2.msra.mxu0 0.0
    %428 = vmatprep.subr.mxu0 0.0
    %429 = vmatpush2.msra.mxu0 0.0
    %430 = vmatprep.subr.mxu0 0.0
    %431 = vmatpush2.msra.mxu0 0.0
    %432 = vmatprep.subr.mxu0 0.0
    %433 = vmatpush2.msra.mxu0 0.0
    %434 = vmatprep.subr.mxu0 0.0
    %435 = vmatpush2.msra.mxu0 0.0
    %436 = vmatprep.subr.mxu0 0.0
    %437 = vmatpush2.msra.mxu0 0.0
    %438 = vmatprep.subr.mxu0 0.0
    %439 = vmatpush2.msra.mxu0 0.0
    %440 = vmatprep.subr.mxu0 0.0
    %441 = vmatpush2.msra.mxu0 0.0
    %442 = vmatprep.subr.mxu0 0.0
    %443 = vmatpush2.msra.mxu0 0.0
    %444 = vmatprep.subr.mxu0 0.0
    %445 = vmatpush2.msra.mxu0 0.0
    %446 = vmatprep.mubr.f32.mxu0 0.0
    %447 = vmatmul.mubr.f32.gmra.mxu0 %v370
    %v448 = vpop.f32.mrf.mxu0
    %v449 = vadd.f32 %v224, %v448
    %v450 = vpop.f32.mrf.mxu0
    %v451 = vadd.f32 %v226, %v450
    %452 = vdwg.mxu0
    %453 = vmatprep.subr.mxu0 0.0
    %454 = vmatpush1.msra.mxu0 0.0
    %455 = vmatprep.subr.mxu0 0.0
    %456 = vmatpush1.msra.mxu0 0.0
    %457 = vmatprep.subr.mxu0 0.0
    %458 = vmatpush1.msra.mxu0 0.0
    %459 = vmatprep.subr.mxu0 0.0
    %460 = vmatpush1.msra.mxu0 0.0
    %461 = vmatprep.subr.mxu0 0.0
    %462 = vmatpush1.msra.mxu0 0.0
    %463 = vmatprep.subr.mxu0 0.0
    %464 = vmatpush1.msra.mxu0 0.0
    %465 = vmatprep.subr.mxu0 0.0
    %466 = vmatpush1.msra.mxu0 0.0
    %467 = vmatprep.subr.mxu0 0.0
    %468 = vmatpush1.msra.mxu0 0.0
    %469 = vmatprep.subr.mxu0 0.0
    %470 = vmatpush1.msra.mxu0 0.0
    %471 = vmatprep.subr.mxu0 0.0
    %472 = vmatpush1.msra.mxu0 0.0
    %473 = vmatprep.subr.mxu0 0.0
    %474 = vmatpush1.msra.mxu0 0.0
    %475 = vmatprep.subr.mxu0 0.0
    %476 = vmatpush1.msra.mxu0 0.0
    %477 = vmatprep.subr.mxu0 0.0
    %478 = vmatpush1.msra.mxu0 0.0
    %479 = vmatprep.subr.mxu0 0.0
    %480 = vmatpush1.msra.mxu0 0.0
    %481 = vmatprep.subr.mxu0 %v378
    %482 = vmatpush1.msra.mxu0 %v376
    %483 = vmatprep.subr.mxu0 %v88
    %484 = vmatpush1.msra.mxu0 %v87
    %485 = vmatprep.subr.mxu0 0.0
    %486 = vmatpush2.msra.mxu0 0.0
    %487 = vmatprep.subr.mxu0 0.0
    %488 = vmatpush2.msra.mxu0 0.0
    %489 = vmatprep.subr.mxu0 0.0
    %490 = vmatpush2.msra.mxu0 0.0
    %491 = vmatprep.subr.mxu0 0.0
    %492 = vmatpush2.msra.mxu0 0.0
    %493 = vmatprep.subr.mxu0 0.0
    %494 = vmatpush2.msra.mxu0 0.0
    %495 = vmatprep.subr.mxu0 0.0
    %496 = vmatpush2.msra.mxu0 0.0
    %497 = vmatprep.subr.mxu0 0.0
    %498 = vmatpush2.msra.mxu0 0.0
    %499 = vmatprep.subr.mxu0 0.0
    %500 = vmatpush2.msra.mxu0 0.0
    %501 = vmatprep.subr.mxu0 0.0
    %502 = vmatpush2.msra.mxu0 0.0
    %503 = vmatprep.subr.mxu0 0.0
    %504 = vmatpush2.msra.mxu0 0.0
    %505 = vmatprep.subr.mxu0 0.0
    %506 = vmatpush2.msra.mxu0 0.0
    %507 = vmatprep.subr.mxu0 0.0
    %508 = vmatpush2.msra.mxu0 0.0
    %509 = vmatprep.subr.mxu0 0.0
    %510 = vmatpush2.msra.mxu0 0.0
    %511 = vmatprep.subr.mxu0 0.0
    %512 = vmatpush2.msra.mxu0 0.0
    %513 = vmatprep.subr.mxu0 0.0
    %514 = vmatpush2.msra.mxu0 0.0
    %515 = vmatprep.subr.mxu0 0.0
    %516 = vmatpush2.msra.mxu0 0.0
    %517 = vmatprep.mubr.f32.mxu0 0.0
    %518 = vmatmul.mubr.f32.gmra.mxu0 %v370
    %v519 = vpop.f32.mrf.mxu0
    %v520 = vadd.f32 %v295, %v519
    %v521 = vpop.f32.mrf.mxu0
    %v522 = vadd.f32 %v297, %v521
    %523 = vdwg.mxu0
    %524 = vmatprep.subr.mxu0 0.0
    %525 = vmatpush1.msra.mxu0 0.0
    %526 = vmatprep.subr.mxu0 0.0
    %527 = vmatpush1.msra.mxu0 0.0
    %528 = vmatprep.subr.mxu0 0.0
    %529 = vmatpush1.msra.mxu0 0.0
    %530 = vmatprep.subr.mxu0 0.0
    %531 = vmatpush1.msra.mxu0 0.0
    %532 = vmatprep.subr.mxu0 0.0
    %533 = vmatpush1.msra.mxu0 0.0
    %534 = vmatprep.subr.mxu0 0.0
    %535 = vmatpush1.msra.mxu0 0.0
    %536 = vmatprep.subr.mxu0 0.0
    %537 = vmatpush1.msra.mxu0 0.0
    %538 = vmatprep.subr.mxu0 0.0
    %539 = vmatpush1.msra.mxu0 0.0
    %540 = vmatprep.subr.mxu0 0.0
    %541 = vmatpush1.msra.mxu0 0.0
    %542 = vmatprep.subr.mxu0 0.0
    %543 = vmatpush1.msra.mxu0 0.0
    %544 = vmatprep.subr.mxu0 0.0
    %545 = vmatpush1.msra.mxu0 0.0
    %546 = vmatprep.subr.mxu0 0.0
    %547 = vmatpush1.msra.mxu0 0.0
    %548 = vmatprep.subr.mxu0 0.0
    %549 = vmatpush1.msra.mxu0 0.0
    %550 = vmatprep.subr.mxu0 0.0
    %551 = vmatpush1.msra.mxu0 0.0
    %552 = vmatprep.subr.mxu0 0.0
    %553 = vmatpush1.msra.mxu0 %v380
    %554 = vmatprep.subr.mxu0 0.0
    %555 = vmatpush1.msra.mxu0 %v89
    %556 = vmatprep.subr.mxu0 0.0
    %557 = vmatpush2.msra.mxu0 0.0
    %558 = vmatprep.subr.mxu0 0.0
    %559 = vmatpush2.msra.mxu0 0.0
    %560 = vmatprep.subr.mxu0 0.0
    %561 = vmatpush2.msra.mxu0 0.0
    %562 = vmatprep.subr.mxu0 0.0
    %563 = vmatpush2.msra.mxu0 0.0
    %564 = vmatprep.subr.mxu0 0.0
    %565 = vmatpush2.msra.mxu0 0.0
    %566 = vmatprep.subr.mxu0 0.0
    %567 = vmatpush2.msra.mxu0 0.0
    %568 = vmatprep.subr.mxu0 0.0
    %569 = vmatpush2.msra.mxu0 0.0
    %570 = vmatprep.subr.mxu0 0.0
    %571 = vmatpush2.msra.mxu0 0.0
    %572 = vmatprep.subr.mxu0 0.0
    %573 = vmatpush2.msra.mxu0 0.0
    %574 = vmatprep.subr.mxu0 0.0
    %575 = vmatpush2.msra.mxu0 0.0
    %576 = vmatprep.subr.mxu0 0.0
    %577 = vmatpush2.msra.mxu0 0.0
    %578 = vmatprep.subr.mxu0 0.0
    %579 = vmatpush2.msra.mxu0 0.0
    %580 = vmatprep.subr.mxu0 0.0
    %581 = vmatpush2.msra.mxu0 0.0
    %582 = vmatprep.subr.mxu0 0.0
    %583 = vmatpush2.msra.mxu0 0.0
    %584 = vmatprep.subr.mxu0 0.0
    %585 = vmatpush2.msra.mxu0 0.0
    %586 = vmatprep.subr.mxu0 0.0
    %587 = vmatpush2.msra.mxu0 0.0
    %588 = vmatprep.mubr.f32.mxu0 0.0
    %589 = vmatmul.mubr.f32.gmra.mxu0 %v370
    %v590 = vpop.f32.mrf.mxu0
    %v591 = vadd.f32 %v366, %v590
    %v592 = vpop.f32.mrf.mxu0
    %593 = vdwg.mxu0
    %s594 = scalar_lea.vmem [#allocation7], 16
    %v595 = vld [vmem:[%s594] sm:$0xff]
    %596 = vrot.lane.b32.xlu0 %v85, 96
    %v597 = vpop.permute.xlu0 %596
    %598 = vrot.lane.b32.xlu0 %v86, 96
    %v599 = vpop.permute.xlu0 %598
    %600 = vrot.lane.b32.xlu0 %v87, 96
    %v601 = vpop.permute.xlu0 %600
    %602 = vrot.lane.b32.xlu0 %v88, 96
    %v603 = vpop.permute.xlu0 %602
    %604 = vrot.lane.b32.xlu0 %v89, 96
    %v605 = vpop.permute.xlu0 %604
    %606 = vrot.lane.b32.xlu0 %v90, 96
    %v607 = vpop.permute.xlu0 %606
    %608 = vrot.lane.b32.xlu0 %v91, 96
    %v609 = vpop.permute.xlu0 %608
    %610 = vrot.lane.b32.xlu0 %v92, 96
    %v611 = vpop.permute.xlu0 %610
    %612 = vrot.lane.b32.xlu0 %v93, 96
    %v613 = vpop.permute.xlu0 %612
    %614 = vrot.lane.b32.xlu0 %v94, 96
    %v615 = vpop.permute.xlu0 %614
    %vm616 = vcmask 785408
    %v617 = vsel %vm616, %v597, %v599
    %v618 = vsel %vm616, %v599, %v601
    %v619 = vsel %vm616, %v601, %v603
    %v620 = vsel %vm616, %v603, %v605
    %v621 = vsel %vm616, %v607, %v609
    %v622 = vsel %vm616, %v609, %v611
    %v623 = vsel %vm616, %v611, %v613
    %v624 = vsel %vm616, %v613, %v615
    %v631 = vsel %vm142, %v595, 0
    %v633 = vsel %vm146, %v621, 0
    %v635 = vsel %vm146, %v622, 0
    %v637 = vsel %vm146, %v623, 0
    %v639 = vsel %vm146, %v624, 0
    %v641 = vsel %vm146, %v615, 0
    %643 = vmatprep.subr.mxu0 0.0
    %644 = vmatpush1.msra.mxu0 0.0
    %645 = vmatprep.subr.mxu0 0.0
    %646 = vmatpush1.msra.mxu0 0.0
    %647 = vmatprep.subr.mxu0 0.0
    %648 = vmatpush1.msra.mxu0 0.0
    %649 = vmatprep.subr.mxu0 0.0
    %650 = vmatpush1.msra.mxu0 0.0
    %651 = vmatprep.subr.mxu0 0.0
    %652 = vmatpush1.msra.mxu0 0.0
    %653 = vmatprep.subr.mxu0 0.0
    %654 = vmatpush1.msra.mxu0 0.0
    %655 = vmatprep.subr.mxu0 0.0
    %656 = vmatpush1.msra.mxu0 0.0
    %657 = vmatprep.subr.mxu0 0.0
    %658 = vmatpush1.msra.mxu0 0.0
    %659 = vmatprep.subr.mxu0 0.0
    %660 = vmatpush1.msra.mxu0 0.0
    %661 = vmatprep.subr.mxu0 0.0
    %662 = vmatpush1.msra.mxu0 0.0
    %663 = vmatprep.subr.mxu0 0.0
    %664 = vmatpush1.msra.mxu0 0.0
    %665 = vmatprep.subr.mxu0 0.0
    %666 = vmatpush1.msra.mxu0 0.0
    %667 = vmatprep.subr.mxu0 0.0
    %668 = vmatpush1.msra.mxu0 0.0
    %669 = vmatprep.subr.mxu0 0.0
    %670 = vmatpush1.msra.mxu0 0.0
    %671 = vmatprep.subr.mxu0 %v635
    %672 = vmatpush1.msra.mxu0 %v633
    %673 = vmatprep.subr.mxu0 %v618
    %674 = vmatpush1.msra.mxu0 %v617
    %675 = vmatprep.subr.mxu0 0.0
    %676 = vmatpush2.msra.mxu0 0.0
    %677 = vmatprep.subr.mxu0 0.0
    %678 = vmatpush2.msra.mxu0 0.0
    %679 = vmatprep.subr.mxu0 0.0
    %680 = vmatpush2.msra.mxu0 0.0
    %681 = vmatprep.subr.mxu0 0.0
    %682 = vmatpush2.msra.mxu0 0.0
    %683 = vmatprep.subr.mxu0 0.0
    %684 = vmatpush2.msra.mxu0 0.0
    %685 = vmatprep.subr.mxu0 0.0
    %686 = vmatpush2.msra.mxu0 0.0
    %687 = vmatprep.subr.mxu0 0.0
    %688 = vmatpush2.msra.mxu0 0.0
    %689 = vmatprep.subr.mxu0 0.0
    %690 = vmatpush2.msra.mxu0 0.0
    %691 = vmatprep.subr.mxu0 0.0
    %692 = vmatpush2.msra.mxu0 0.0
    %693 = vmatprep.subr.mxu0 0.0
    %694 = vmatpush2.msra.mxu0 0.0
    %695 = vmatprep.subr.mxu0 0.0
    %696 = vmatpush2.msra.mxu0 0.0
    %697 = vmatprep.subr.mxu0 0.0
    %698 = vmatpush2.msra.mxu0 0.0
    %699 = vmatprep.subr.mxu0 0.0
    %700 = vmatpush2.msra.mxu0 0.0
    %701 = vmatprep.subr.mxu0 0.0
    %702 = vmatpush2.msra.mxu0 0.0
    %703 = vmatprep.subr.mxu0 0.0
    %704 = vmatpush2.msra.mxu0 0.0
    %705 = vmatprep.subr.mxu0 0.0
    %706 = vmatpush2.msra.mxu0 0.0
    %707 = vmatprep.mubr.f32.mxu0 0.0
    %708 = vmatmul.mubr.f32.gmra.mxu0 %v631
    %v709 = vpop.f32.mrf.mxu0
    %v710 = vadd.f32 0.0, %v709
    %v711 = vpop.f32.mrf.mxu0
    %v712 = vadd.f32 0.0, %v711
    %713 = vdwg.mxu0
    %714 = vmatprep.subr.mxu0 0.0
    %715 = vmatpush1.msra.mxu0 0.0
    %716 = vmatprep.subr.mxu0 0.0
    %717 = vmatpush1.msra.mxu0 0.0
    %718 = vmatprep.subr.mxu0 0.0
    %719 = vmatpush1.msra.mxu0 0.0
    %720 = vmatprep.subr.mxu0 0.0
    %721 = vmatpush1.msra.mxu0 0.0
    %722 = vmatprep.subr.mxu0 0.0
    %723 = vmatpush1.msra.mxu0 0.0
    %724 = vmatprep.subr.mxu0 0.0
    %725 = vmatpush1.msra.mxu0 0.0
    %726 = vmatprep.subr.mxu0 0.0
    %727 = vmatpush1.msra.mxu0 0.0
    %728 = vmatprep.subr.mxu0 0.0
    %729 = vmatpush1.msra.mxu0 0.0
    %730 = vmatprep.subr.mxu0 0.0
    %731 = vmatpush1.msra.mxu0 0.0
    %732 = vmatprep.subr.mxu0 0.0
    %733 = vmatpush1.msra.mxu0 0.0
    %734 = vmatprep.subr.mxu0 0.0
    %735 = vmatpush1.msra.mxu0 0.0
    %736 = vmatprep.subr.mxu0 0.0
    %737 = vmatpush1.msra.mxu0 0.0
    %738 = vmatprep.subr.mxu0 0.0
    %739 = vmatpush1.msra.mxu0 0.0
    %740 = vmatprep.subr.mxu0 0.0
    %741 = vmatpush1.msra.mxu0 0.0
    %742 = vmatprep.subr.mxu0 %v639
    %743 = vmatpush1.msra.mxu0 %v637
    %744 = vmatprep.subr.mxu0 %v620
    %745 = vmatpush1.msra.mxu0 %v619
    %746 = vmatprep.subr.mxu0 0.0
    %747 = vmatpush2.msra.mxu0 0.0
    %748 = vmatprep.subr.mxu0 0.0
    %749 = vmatpush2.msra.mxu0 0.0
    %750 = vmatprep.subr.mxu0 0.0
    %751 = vmatpush2.msra.mxu0 0.0
    %752 = vmatprep.subr.mxu0 0.0
    %753 = vmatpush2.msra.mxu0 0.0
    %754 = vmatprep.subr.mxu0 0.0
    %755 = vmatpush2.msra.mxu0 0.0
    %756 = vmatprep.subr.mxu0 0.0
    %757 = vmatpush2.msra.mxu0 0.0
    %758 = vmatprep.subr.mxu0 0.0
    %759 = vmatpush2.msra.mxu0 0.0
    %760 = vmatprep.subr.mxu0 0.0
    %761 = vmatpush2.msra.mxu0 0.0
    %762 = vmatprep.subr.mxu0 0.0
    %763 = vmatpush2.msra.mxu0 0.0
    %764 = vmatprep.subr.mxu0 0.0
    %765 = vmatpush2.msra.mxu0 0.0
    %766 = vmatprep.subr.mxu0 0.0
    %767 = vmatpush2.msra.mxu0 0.0
    %768 = vmatprep.subr.mxu0 0.0
    %769 = vmatpush2.msra.mxu0 0.0
    %770 = vmatprep.subr.mxu0 0.0
    %771 = vmatpush2.msra.mxu0 0.0
    %772 = vmatprep.subr.mxu0 0.0
    %773 = vmatpush2.msra.mxu0 0.0
    %774 = vmatprep.subr.mxu0 0.0
    %775 = vmatpush2.msra.mxu0 0.0
    %776 = vmatprep.subr.mxu0 0.0
    %777 = vmatpush2.msra.mxu0 0.0
    %778 = vmatprep.mubr.f32.mxu0 0.0
    %779 = vmatmul.mubr.f32.gmra.mxu0 %v631
    %v780 = vpop.f32.mrf.mxu0
    %v781 = vadd.f32 0.0, %v780
    %v782 = vpop.f32.mrf.mxu0
    %v783 = vadd.f32 0.0, %v782
    %784 = vdwg.mxu0
    %785 = vmatprep.subr.mxu0 0.0
    %786 = vmatpush1.msra.mxu0 0.0
    %787 = vmatprep.subr.mxu0 0.0
    %788 = vmatpush1.msra.mxu0 0.0
    %789 = vmatprep.subr.mxu0 0.0
    %790 = vmatpush1.msra.mxu0 0.0
    %791 = vmatprep.subr.mxu0 0.0
    %792 = vmatpush1.msra.mxu0 0.0
    %793 = vmatprep.subr.mxu0 0.0
    %794 = vmatpush1.msra.mxu0 0.0
    %795 = vmatprep.subr.mxu0 0.0
    %796 = vmatpush1.msra.mxu0 0.0
    %797 = vmatprep.subr.mxu0 0.0
    %798 = vmatpush1.msra.mxu0 0.0
    %799 = vmatprep.subr.mxu0 0.0
    %800 = vmatpush1.msra.mxu0 0.0
    %801 = vmatprep.subr.mxu0 0.0
    %802 = vmatpush1.msra.mxu0 0.0
    %803 = vmatprep.subr.mxu0 0.0
    %804 = vmatpush1.msra.mxu0 0.0
    %805 = vmatprep.subr.mxu0 0.0
    %806 = vmatpush1.msra.mxu0 0.0
    %807 = vmatprep.subr.mxu0 0.0
    %808 = vmatpush1.msra.mxu0 0.0
    %809 = vmatprep.subr.mxu0 0.0
    %810 = vmatpush1.msra.mxu0 0.0
    %811 = vmatprep.subr.mxu0 0.0
    %812 = vmatpush1.msra.mxu0 0.0
    %813 = vmatprep.subr.mxu0 0.0
    %814 = vmatpush1.msra.mxu0 %v641
    %815 = vmatprep.subr.mxu0 0.0
    %816 = vmatpush1.msra.mxu0 %v605
    %817 = vmatprep.subr.mxu0 0.0
    %818 = vmatpush2.msra.mxu0 0.0
    %819 = vmatprep.subr.mxu0 0.0
    %820 = vmatpush2.msra.mxu0 0.0
    %821 = vmatprep.subr.mxu0 0.0
    %822 = vmatpush2.msra.mxu0 0.0
    %823 = vmatprep.subr.mxu0 0.0
    %824 = vmatpush2.msra.mxu0 0.0
    %825 = vmatprep.subr.mxu0 0.0
    %826 = vmatpush2.msra.mxu0 0.0
    %827 = vmatprep.subr.mxu0 0.0
    %828 = vmatpush2.msra.mxu0 0.0
    %829 = vmatprep.subr.mxu0 0.0
    %830 = vmatpush2.msra.mxu0 0.0
    %831 = vmatprep.subr.mxu0 0.0
    %832 = vmatpush2.msra.mxu0 0.0
    %833 = vmatprep.subr.mxu0 0.0
    %834 = vmatpush2.msra.mxu0 0.0
    %835 = vmatprep.subr.mxu0 0.0
    %836 = vmatpush2.msra.mxu0 0.0
    %837 = vmatprep.subr.mxu0 0.0
    %838 = vmatpush2.msra.mxu0 0.0
    %839 = vmatprep.subr.mxu0 0.0
    %840 = vmatpush2.msra.mxu0 0.0
    %841 = vmatprep.subr.mxu0 0.0
    %842 = vmatpush2.msra.mxu0 0.0
    %843 = vmatprep.subr.mxu0 0.0
    %844 = vmatpush2.msra.mxu0 0.0
    %845 = vmatprep.subr.mxu0 0.0
    %846 = vmatpush2.msra.mxu0 0.0
    %847 = vmatprep.subr.mxu0 0.0
    %848 = vmatpush2.msra.mxu0 0.0
    %849 = vmatprep.mubr.f32.mxu0 0.0
    %850 = vmatmul.mubr.f32.gmra.mxu0 %v631
    %v851 = vpop.f32.mrf.mxu0
    %v852 = vadd.f32 0.0, %v851
    %v853 = vpop.f32.mrf.mxu0
    %854 = vdwg.mxu0
    %v855 = vadd.f32 %v449, %v710
    %v856 = vadd.f32 %v451, %v712
    %v857 = vadd.f32 %v520, %v781
    %v858 = vadd.f32 %v522, %v783
    %v859 = vadd.f32 %v591, %v852
    %v860 = vld [vmem:[#allocation5] sm:$0xff]
    %v861 = vld [vmem:[#allocation5 + $0x8] sm:$0xff]
    %v862 = vld [vmem:[#allocation5 + $0x10] sm:$0xf]
    %v863 = vld [vmem:[#allocation5 + $0x18] sm:$0xf]
    %v864 = vld [vmem:[#allocation8] sm:$0xff]
    %s865 = scalar_lea.vmem [#allocation8], 8
    %v866 = vld [vmem:[%s865] sm:$0xff]
    %871 = vrot.lane.b32.xlu0 %v860, 120
    %v872 = vpop.permute.xlu0 %871
    %873 = vrot.lane.b32.xlu0 %v861, 120
    %v874 = vpop.permute.xlu0 %873
    %875 = vrot.lane.b32.xlu0 %v862, 120
    %v876 = vpop.permute.xlu0 %875
    %877 = vrot.lane.b32.xlu0 %v863, 120
    %v878 = vpop.permute.xlu0 %877
    %vm879 = vcmask 982016
    %v880 = vsel %vm879, %v872, %v874
    %v881 = vsel %vm879, %v876, %v878
    %v885 = vsel %vm142, %v866, 0
    %v887 = vsel %vm146, %v881, 0
    %v889 = vsel %vm146, %v878, 0
    %891 = vmatprep.subr.mxu0 0.0
    %892 = vmatpush1.msra.mxu0 0.0
    %893 = vmatprep.subr.mxu0 0.0
    %894 = vmatpush1.msra.mxu0 0.0
    %895 = vmatprep.subr.mxu0 0.0
    %896 = vmatpush1.msra.mxu0 0.0
    %897 = vmatprep.subr.mxu0 0.0
    %898 = vmatpush1.msra.mxu0 0.0
    %899 = vmatprep.subr.mxu0 0.0
    %900 = vmatpush1.msra.mxu0 0.0
    %901 = vmatprep.subr.mxu0 0.0
    %902 = vmatpush1.msra.mxu0 0.0
    %903 = vmatprep.subr.mxu0 0.0
    %904 = vmatpush1.msra.mxu0 0.0
    %905 = vmatprep.subr.mxu0 0.0
    %906 = vmatpush1.msra.mxu0 0.0
    %907 = vmatprep.subr.mxu0 0.0
    %908 = vmatpush1.msra.mxu0 0.0
    %909 = vmatprep.subr.mxu0 0.0
    %910 = vmatpush1.msra.mxu0 0.0
    %911 = vmatprep.subr.mxu0 0.0
    %912 = vmatpush1.msra.mxu0 0.0
    %913 = vmatprep.subr.mxu0 0.0
    %914 = vmatpush1.msra.mxu0 0.0
    %915 = vmatprep.subr.mxu0 0.0
    %916 = vmatpush1.msra.mxu0 0.0
    %917 = vmatprep.subr.mxu0 0.0
    %918 = vmatpush1.msra.mxu0 0.0
    %919 = vmatprep.subr.mxu0 %v889
    %920 = vmatpush1.msra.mxu0 %v887
    %921 = vmatprep.subr.mxu0 %v874
    %922 = vmatpush1.msra.mxu0 %v880
    %923 = vmatprep.subr.mxu0 0.0
    %924 = vmatpush2.msra.mxu0 0.0
    %925 = vmatprep.subr.mxu0 0.0
    %926 = vmatpush2.msra.mxu0 0.0
    %927 = vmatprep.subr.mxu0 0.0
    %928 = vmatpush2.msra.mxu0 0.0
    %929 = vmatprep.subr.mxu0 0.0
    %930 = vmatpush2.msra.mxu0 0.0
    %931 = vmatprep.subr.mxu0 0.0
    %932 = vmatpush2.msra.mxu0 0.0
    %933 = vmatprep.subr.mxu0 0.0
    %934 = vmatpush2.msra.mxu0 0.0
    %935 = vmatprep.subr.mxu0 0.0
    %936 = vmatpush2.msra.mxu0 0.0
    %937 = vmatprep.subr.mxu0 0.0
    %938 = vmatpush2.msra.mxu0 0.0
    %939 = vmatprep.subr.mxu0 0.0
    %940 = vmatpush2.msra.mxu0 0.0
    %941 = vmatprep.subr.mxu0 0.0
    %942 = vmatpush2.msra.mxu0 0.0
    %943 = vmatprep.subr.mxu0 0.0
    %944 = vmatpush2.msra.mxu0 0.0
    %945 = vmatprep.subr.mxu0 0.0
    %946 = vmatpush2.msra.mxu0 0.0
    %947 = vmatprep.subr.mxu0 0.0
    %948 = vmatpush2.msra.mxu0 0.0
    %949 = vmatprep.subr.mxu0 0.0
    %950 = vmatpush2.msra.mxu0 0.0
    %951 = vmatprep.subr.mxu0 0.0
    %952 = vmatpush2.msra.mxu0 0.0
    %953 = vmatprep.subr.mxu0 0.0
    %954 = vmatpush2.msra.mxu0 0.0
    %955 = vmatprep.mubr.f32.mxu0 0.0
    %956 = vmatmul.mubr.f32.gmra.mxu0 %v885
    %v957 = vpop.f32.mrf.mxu0
    %v958 = vadd.f32 0.0, %v957
    %v959 = vpop.f32.mrf.mxu0
    %v960 = vadd.f32 0.0, %v959
    %961 = vdwg.mxu0
    %v963 = vsel %vm142, %v864, 0
    %v965 = vsel %vm146, %v862, 0
    %v967 = vsel %vm146, %v863, 0
    %969 = vmatprep.subr.mxu0 0.0
    %970 = vmatpush1.msra.mxu0 0.0
    %971 = vmatprep.subr.mxu0 0.0
    %972 = vmatpush1.msra.mxu0 0.0
    %973 = vmatprep.subr.mxu0 0.0
    %974 = vmatpush1.msra.mxu0 0.0
    %975 = vmatprep.subr.mxu0 0.0
    %976 = vmatpush1.msra.mxu0 0.0
    %977 = vmatprep.subr.mxu0 0.0
    %978 = vmatpush1.msra.mxu0 0.0
    %979 = vmatprep.subr.mxu0 0.0
    %980 = vmatpush1.msra.mxu0 0.0
    %981 = vmatprep.subr.mxu0 0.0
    %982 = vmatpush1.msra.mxu0 0.0
    %983 = vmatprep.subr.mxu0 0.0
    %984 = vmatpush1.msra.mxu0 0.0
    %985 = vmatprep.subr.mxu0 0.0
    %986 = vmatpush1.msra.mxu0 0.0
    %987 = vmatprep.subr.mxu0 0.0
    %988 = vmatpush1.msra.mxu0 0.0
    %989 = vmatprep.subr.mxu0 0.0
    %990 = vmatpush1.msra.mxu0 0.0
    %991 = vmatprep.subr.mxu0 0.0
    %992 = vmatpush1.msra.mxu0 0.0
    %993 = vmatprep.subr.mxu0 0.0
    %994 = vmatpush1.msra.mxu0 0.0
    %995 = vmatprep.subr.mxu0 0.0
    %996 = vmatpush1.msra.mxu0 0.0
    %997 = vmatprep.subr.mxu0 %v967
    %998 = vmatpush1.msra.mxu0 %v965
    %999 = vmatprep.subr.mxu0 %v861
    %1000 = vmatpush1.msra.mxu0 %v860
    %1001 = vmatprep.subr.mxu0 0.0
    %1002 = vmatpush2.msra.mxu0 0.0
    %1003 = vmatprep.subr.mxu0 0.0
    %1004 = vmatpush2.msra.mxu0 0.0
    %1005 = vmatprep.subr.mxu0 0.0
    %1006 = vmatpush2.msra.mxu0 0.0
    %1007 = vmatprep.subr.mxu0 0.0
    %1008 = vmatpush2.msra.mxu0 0.0
    %1009 = vmatprep.subr.mxu0 0.0
    %1010 = vmatpush2.msra.mxu0 0.0
    %1011 = vmatprep.subr.mxu0 0.0
    %1012 = vmatpush2.msra.mxu0 0.0
    %1013 = vmatprep.subr.mxu0 0.0
    %1014 = vmatpush2.msra.mxu0 0.0
    %1015 = vmatprep.subr.mxu0 0.0
    %1016 = vmatpush2.msra.mxu0 0.0
    %1017 = vmatprep.subr.mxu0 0.0
    %1018 = vmatpush2.msra.mxu0 0.0
    %1019 = vmatprep.subr.mxu0 0.0
    %1020 = vmatpush2.msra.mxu0 0.0
    %1021 = vmatprep.subr.mxu0 0.0
    %1022 = vmatpush2.msra.mxu0 0.0
    %1023 = vmatprep.subr.mxu0 0.0
    %1024 = vmatpush2.msra.mxu0 0.0
    %1025 = vmatprep.subr.mxu0 0.0
    %1026 = vmatpush2.msra.mxu0 0.0
    %1027 = vmatprep.subr.mxu0 0.0
    %1028 = vmatpush2.msra.mxu0 0.0
    %1029 = vmatprep.subr.mxu0 0.0
    %1030 = vmatpush2.msra.mxu0 0.0
    %1031 = vmatprep.subr.mxu0 0.0
    %1032 = vmatpush2.msra.mxu0 0.0
    %1033 = vmatprep.mubr.f32.mxu0 0.0
    %1034 = vmatmul.mubr.f32.gmra.mxu0 %v963
    %v1035 = vpop.f32.mrf.mxu0
    %v1036 = vadd.f32 %v958, %v1035
    %v1037 = vpop.f32.mrf.mxu0
    %v1038 = vadd.f32 %v960, %v1037
    %1039 = vdwg.mxu0
    %s1040 = scalar_lea.vmem [#allocation8], 16
    %v1041 = vld [vmem:[%s1040] sm:$0xff]
    %1042 = vrot.lane.b32.xlu0 %v860, 112
    %v1043 = vpop.permute.xlu0 %1042
    %1044 = vrot.lane.b32.xlu0 %v861, 112
    %v1045 = vpop.permute.xlu0 %1044
    %1046 = vrot.lane.b32.xlu0 %v862, 112
    %v1047 = vpop.permute.xlu0 %1046
    %1048 = vrot.lane.b32.xlu0 %v863, 112
    %v1049 = vpop.permute.xlu0 %1048
    %v1050 = vsel %vm128, %v1043, %v1045
    %v1051 = vsel %vm128, %v1047, %v1049
    %v1055 = vsel %vm142, %v1041, 0
    %v1057 = vsel %vm146, %v1051, 0
    %v1059 = vsel %vm146, %v1049, 0
    %1061 = vmatprep.subr.mxu0 0.0
    %1062 = vmatpush1.msra.mxu0 0.0
    %1063 = vmatprep.subr.mxu0 0.0
    %1064 = vmatpush1.msra.mxu0 0.0
    %1065 = vmatprep.subr.mxu0 0.0
    %1066 = vmatpush1.msra.mxu0 0.0
    %1067 = vmatprep.subr.mxu0 0.0
    %1068 = vmatpush1.msra.mxu0 0.0
    %1069 = vmatprep.subr.mxu0 0.0
    %1070 = vmatpush1.msra.mxu0 0.0
    %1071 = vmatprep.subr.mxu0 0.0
    %1072 = vmatpush1.msra.mxu0 0.0
    %1073 = vmatprep.subr.mxu0 0.0
    %1074 = vmatpush1.msra.mxu0 0.0
    %1075 = vmatprep.subr.mxu0 0.0
    %1076 = vmatpush1.msra.mxu0 0.0
    %1077 = vmatprep.subr.mxu0 0.0
    %1078 = vmatpush1.msra.mxu0 0.0
    %1079 = vmatprep.subr.mxu0 0.0
    %1080 = vmatpush1.msra.mxu0 0.0
    %1081 = vmatprep.subr.mxu0 0.0
    %1082 = vmatpush1.msra.mxu0 0.0
    %1083 = vmatprep.subr.mxu0 0.0
    %1084 = vmatpush1.msra.mxu0 0.0
    %1085 = vmatprep.subr.mxu0 0.0
    %1086 = vmatpush1.msra.mxu0 0.0
    %1087 = vmatprep.subr.mxu0 0.0
    %1088 = vmatpush1.msra.mxu0 0.0
    %1089 = vmatprep.subr.mxu0 %v1059
    %1090 = vmatpush1.msra.mxu0 %v1057
    %1091 = vmatprep.subr.mxu0 %v1045
    %1092 = vmatpush1.msra.mxu0 %v1050
    %1093 = vmatprep.subr.mxu0 0.0
    %1094 = vmatpush2.msra.mxu0 0.0
    %1095 = vmatprep.subr.mxu0 0.0
    %1096 = vmatpush2.msra.mxu0 0.0
    %1097 = vmatprep.subr.mxu0 0.0
    %1098 = vmatpush2.msra.mxu0 0.0
    %1099 = vmatprep.subr.mxu0 0.0
    %1100 = vmatpush2.msra.mxu0 0.0
    %1101 = vmatprep.subr.mxu0 0.0
    %1102 = vmatpush2.msra.mxu0 0.0
    %1103 = vmatprep.subr.mxu0 0.0
    %1104 = vmatpush2.msra.mxu0 0.0
    %1105 = vmatprep.subr.mxu0 0.0
    %1106 = vmatpush2.msra.mxu0 0.0
    %1107 = vmatprep.subr.mxu0 0.0
    %1108 = vmatpush2.msra.mxu0 0.0
    %1109 = vmatprep.subr.mxu0 0.0
    %1110 = vmatpush2.msra.mxu0 0.0
    %1111 = vmatprep.subr.mxu0 0.0
    %1112 = vmatpush2.msra.mxu0 0.0
    %1113 = vmatprep.subr.mxu0 0.0
    %1114 = vmatpush2.msra.mxu0 0.0
    %1115 = vmatprep.subr.mxu0 0.0
    %1116 = vmatpush2.msra.mxu0 0.0
    %1117 = vmatprep.subr.mxu0 0.0
    %1118 = vmatpush2.msra.mxu0 0.0
    %1119 = vmatprep.subr.mxu0 0.0
    %1120 = vmatpush2.msra.mxu0 0.0
    %1121 = vmatprep.subr.mxu0 0.0
    %1122 = vmatpush2.msra.mxu0 0.0
    %1123 = vmatprep.subr.mxu0 0.0
    %1124 = vmatpush2.msra.mxu0 0.0
    %1125 = vmatprep.mubr.f32.mxu0 0.0
    %1126 = vmatmul.mubr.f32.gmra.mxu0 %v1055
    %v1127 = vpop.f32.mrf.mxu0
    %v1128 = vadd.f32 0.0, %v1127
    %v1129 = vpop.f32.mrf.mxu0
    %v1130 = vadd.f32 0.0, %v1129
    %1131 = vdwg.mxu0
    %v1132 = vadd.f32 %v1036, %v1128
    %v1133 = vadd.f32 %v1038, %v1130
    %v1134 = vlaneseq
    %v1135 = vshrl.u32 %v1134, 7
    %v1136 = vadd.s32 %v1135, 8
    %v1137 = vadd.s32 %v1135, 16
    %v1138 = vadd.s32 %v1135, 24
    %v1139 = vadd.s32 %v1135, 32
    %v1140 = vadd.s32 %v1135, 40
    %v1141 = vadd.s32 %v1135, 48
    %v1142 = vadd.s32 %v1135, 56
    %v1143 = vadd.s32 %v1135, 64
    %v1144 = vadd.s32 %v1135, 72
    %v1145 = vadd.s32 %v1135, 80
    %v1146 = vadd.s32 %v1135, 88
    %v1147 = vadd.s32 %v1135, 96
    %v1148 = vadd.s32 %v1135, 104
    %v1149 = vadd.s32 %v1135, 112
    %v1150 = vadd.s32 %v1135, 120
    %v1151 = vadd.s32 %v1135, 128
    %v1152 = vadd.s32 %v1135, 136
    %v1153 = vadd.s32 %v1135, 144
    %v1154 = vadd.s32 %v1135, 152
    %v1155 = vld [vmem:[%s4] sm:$0x1f]
    %v1156 = vlaneseq
    %v1157 = vshrl.u32 %v1156, 7
    %v1158 = vsub.s32 0, %v1157
    %v1159 = vrot.slane %v1155, %v1158
    %v1160 = vlaneseq
    %v1161 = vshrl.u32 %v1160, 7
    %v1162 = vsub.s32 1, %v1161
    %v1163 = vrot.slane %v1155, %v1162
    %v1164 = vlaneseq
    %v1165 = vshrl.u32 %v1164, 7
    %v1166 = vsub.s32 2, %v1165
    %v1167 = vrot.slane %v1155, %v1166
    %v1168 = vlaneseq
    %v1169 = vshrl.u32 %v1168, 7
    %v1170 = vsub.s32 3, %v1169
    %v1171 = vrot.slane %v1155, %v1170
    %v1172 = vlaneseq
    %v1173 = vshrl.u32 %v1172, 7
    %v1174 = vsub.s32 4, %v1173
    %v1175 = vrot.slane %v1155, %v1174
    %vm1176 = vcmp.eq.s32.totalorder %v1135, %v1159
    %vm1177 = vcmp.eq.s32.totalorder %v1135, %v1163
    %vm1178 = vcmp.eq.s32.totalorder %v1135, %v1167
    %vm1179 = vcmp.eq.s32.totalorder %v1135, %v1171
    %vm1180 = vcmp.eq.s32.totalorder %v1135, %v1175
    %vm1181 = vcmp.eq.s32.totalorder %v1136, %v1159
    %vm1182 = vcmp.eq.s32.totalorder %v1136, %v1163
    %vm1183 = vcmp.eq.s32.totalorder %v1136, %v1167
    %vm1184 = vcmp.eq.s32.totalorder %v1136, %v1171
    %vm1185 = vcmp.eq.s32.totalorder %v1136, %v1175
    %vm1186 = vcmp.eq.s32.totalorder %v1137, %v1159
    %vm1187 = vcmp.eq.s32.totalorder %v1137, %v1163
    %vm1188 = vcmp.eq.s32.totalorder %v1137, %v1167
    %vm1189 = vcmp.eq.s32.totalorder %v1137, %v1171
    %vm1190 = vcmp.eq.s32.totalorder %v1137, %v1175
    %vm1191 = vcmp.eq.s32.totalorder %v1138, %v1159
    %vm1192 = vcmp.eq.s32.totalorder %v1138, %v1163
    %vm1193 = vcmp.eq.s32.totalorder %v1138, %v1167
    %vm1194 = vcmp.eq.s32.totalorder %v1138, %v1171
    %vm1195 = vcmp.eq.s32.totalorder %v1138, %v1175
    %vm1196 = vcmp.eq.s32.totalorder %v1139, %v1159
    %vm1197 = vcmp.eq.s32.totalorder %v1139, %v1163
    %vm1198 = vcmp.eq.s32.totalorder %v1139, %v1167
    %vm1199 = vcmp.eq.s32.totalorder %v1139, %v1171
    %vm1200 = vcmp.eq.s32.totalorder %v1139, %v1175
    %vm1201 = vcmp.eq.s32.totalorder %v1140, %v1159
    %vm1202 = vcmp.eq.s32.totalorder %v1140, %v1163
    %vm1203 = vcmp.eq.s32.totalorder %v1140, %v1167
    %vm1204 = vcmp.eq.s32.totalorder %v1140, %v1171
    %vm1205 = vcmp.eq.s32.totalorder %v1140, %v1175
    %vm1206 = vcmp.eq.s32.totalorder %v1141, %v1159
    %vm1207 = vcmp.eq.s32.totalorder %v1141, %v1163
    %vm1208 = vcmp.eq.s32.totalorder %v1141, %v1167
    %vm1209 = vcmp.eq.s32.totalorder %v1141, %v1171
    %vm1210 = vcmp.eq.s32.totalorder %v1141, %v1175
    %vm1211 = vcmp.eq.s32.totalorder %v1142, %v1159
    %vm1212 = vcmp.eq.s32.totalorder %v1142, %v1163
    %vm1213 = vcmp.eq.s32.totalorder %v1142, %v1167
    %vm1214 = vcmp.eq.s32.totalorder %v1142, %v1171
    %vm1215 = vcmp.eq.s32.totalorder %v1142, %v1175
    %vm1216 = vcmp.eq.s32.totalorder %v1143, %v1159
    %vm1217 = vcmp.eq.s32.totalorder %v1143, %v1163
    %vm1218 = vcmp.eq.s32.totalorder %v1143, %v1167
    %vm1219 = vcmp.eq.s32.totalorder %v1143, %v1171
    %vm1220 = vcmp.eq.s32.totalorder %v1143, %v1175
    %vm1221 = vcmp.eq.s32.totalorder %v1144, %v1159
    %vm1222 = vcmp.eq.s32.totalorder %v1144, %v1163
    %vm1223 = vcmp.eq.s32.totalorder %v1144, %v1167
    %vm1224 = vcmp.eq.s32.totalorder %v1144, %v1171
    %vm1225 = vcmp.eq.s32.totalorder %v1144, %v1175
    %vm1226 = vcmp.eq.s32.totalorder %v1145, %v1159
    %vm1227 = vcmp.eq.s32.totalorder %v1145, %v1163
    %vm1228 = vcmp.eq.s32.totalorder %v1145, %v1167
    %vm1229 = vcmp.eq.s32.totalorder %v1145, %v1171
    %vm1230 = vcmp.eq.s32.totalorder %v1145, %v1175
    %vm1231 = vcmp.eq.s32.totalorder %v1146, %v1159
    %vm1232 = vcmp.eq.s32.totalorder %v1146, %v1163
    %vm1233 = vcmp.eq.s32.totalorder %v1146, %v1167
    %vm1234 = vcmp.eq.s32.totalorder %v1146, %v1171
    %vm1235 = vcmp.eq.s32.totalorder %v1146, %v1175
    %vm1236 = vcmp.eq.s32.totalorder %v1147, %v1159
    %vm1237 = vcmp.eq.s32.totalorder %v1147, %v1163
    %vm1238 = vcmp.eq.s32.totalorder %v1147, %v1167
    %vm1239 = vcmp.eq.s32.totalorder %v1147, %v1171
    %vm1240 = vcmp.eq.s32.totalorder %v1147, %v1175
    %vm1241 = vcmp.eq.s32.totalorder %v1148, %v1159
    %vm1242 = vcmp.eq.s32.totalorder %v1148, %v1163
    %vm1243 = vcmp.eq.s32.totalorder %v1148, %v1167
    %vm1244 = vcmp.eq.s32.totalorder %v1148, %v1171
    %vm1245 = vcmp.eq.s32.totalorder %v1148, %v1175
    %vm1246 = vcmp.eq.s32.totalorder %v1149, %v1159
    %vm1247 = vcmp.eq.s32.totalorder %v1149, %v1163
    %vm1248 = vcmp.eq.s32.totalorder %v1149, %v1167
    %vm1249 = vcmp.eq.s32.totalorder %v1149, %v1171
    %vm1250 = vcmp.eq.s32.totalorder %v1149, %v1175
    %vm1251 = vcmp.eq.s32.totalorder %v1150, %v1159
    %vm1252 = vcmp.eq.s32.totalorder %v1150, %v1163
    %vm1253 = vcmp.eq.s32.totalorder %v1150, %v1167
    %vm1254 = vcmp.eq.s32.totalorder %v1150, %v1171
    %vm1255 = vcmp.eq.s32.totalorder %v1150, %v1175
    %vm1256 = vcmp.eq.s32.totalorder %v1151, %v1159
    %vm1257 = vcmp.eq.s32.totalorder %v1151, %v1163
    %vm1258 = vcmp.eq.s32.totalorder %v1151, %v1167
    %vm1259 = vcmp.eq.s32.totalorder %v1151, %v1171
    %vm1260 = vcmp.eq.s32.totalorder %v1151, %v1175
    %vm1261 = vcmp.eq.s32.totalorder %v1152, %v1159
    %vm1262 = vcmp.eq.s32.totalorder %v1152, %v1163
    %vm1263 = vcmp.eq.s32.totalorder %v1152, %v1167
    %vm1264 = vcmp.eq.s32.totalorder %v1152, %v1171
    %vm1265 = vcmp.eq.s32.totalorder %v1152, %v1175
    %vm1266 = vcmp.eq.s32.totalorder %v1153, %v1159
    %vm1267 = vcmp.eq.s32.totalorder %v1153, %v1163
    %vm1268 = vcmp.eq.s32.totalorder %v1153, %v1167
    %vm1269 = vcmp.eq.s32.totalorder %v1153, %v1171
    %vm1270 = vcmp.eq.s32.totalorder %v1153, %v1175
    %vm1271 = vcmp.eq.s32.totalorder %v1154, %v1159
    %vm1272 = vcmp.eq.s32.totalorder %v1154, %v1163
    %vm1273 = vcmp.eq.s32.totalorder %v1154, %v1167
    %vm1274 = vcmp.eq.s32.totalorder %v1154, %v1171
    %vm1275 = vcmp.eq.s32.totalorder %v1154, %v1175
    %v1276 = vsel %vm1176, 1.0, 0.0
    %v1277 = vsel %vm1177, 1.0, 0.0
    %v1278 = vsel %vm1178, 1.0, 0.0
    %v1279 = vsel %vm1179, 1.0, 0.0
    %v1280 = vsel %vm1180, 1.0, 0.0
    %v1281 = vsel %vm1181, 1.0, 0.0
    %v1282 = vsel %vm1182, 1.0, 0.0
    %v1283 = vsel %vm1183, 1.0, 0.0
    %v1284 = vsel %vm1184, 1.0, 0.0
    %v1285 = vsel %vm1185, 1.0, 0.0
    %v1286 = vsel %vm1186, 1.0, 0.0
    %v1287 = vsel %vm1187, 1.0, 0.0
    %v1288 = vsel %vm1188, 1.0, 0.0
    %v1289 = vsel %vm1189, 1.0, 0.0
    %v1290 = vsel %vm1190, 1.0, 0.0
    %v1291 = vsel %vm1191, 1.0, 0.0
    %v1292 = vsel %vm1192, 1.0, 0.0
    %v1293 = vsel %vm1193, 1.0, 0.0
    %v1294 = vsel %vm1194, 1.0, 0.0
    %v1295 = vsel %vm1195, 1.0, 0.0
    %v1296 = vsel %vm1196, 1.0, 0.0
    %v1297 = vsel %vm1197, 1.0, 0.0
    %v1298 = vsel %vm1198, 1.0, 0.0
    %v1299 = vsel %vm1199, 1.0, 0.0
    %v1300 = vsel %vm1200, 1.0, 0.0
    %v1301 = vsel %vm1201, 1.0, 0.0
    %v1302 = vsel %vm1202, 1.0, 0.0
    %v1303 = vsel %vm1203, 1.0, 0.0
    %v1304 = vsel %vm1204, 1.0, 0.0
    %v1305 = vsel %vm1205, 1.0, 0.0
    %v1306 = vsel %vm1206, 1.0, 0.0
    %v1307 = vsel %vm1207, 1.0, 0.0
    %v1308 = vsel %vm1208, 1.0, 0.0
    %v1309 = vsel %vm1209, 1.0, 0.0
    %v1310 = vsel %vm1210, 1.0, 0.0
    %v1311 = vsel %vm1211, 1.0, 0.0
    %v1312 = vsel %vm1212, 1.0, 0.0
    %v1313 = vsel %vm1213, 1.0, 0.0
    %v1314 = vsel %vm1214, 1.0, 0.0
    %v1315 = vsel %vm1215, 1.0, 0.0
    %v1316 = vsel %vm1216, 1.0, 0.0
    %v1317 = vsel %vm1217, 1.0, 0.0
    %v1318 = vsel %vm1218, 1.0, 0.0
    %v1319 = vsel %vm1219, 1.0, 0.0
    %v1320 = vsel %vm1220, 1.0, 0.0
    %v1321 = vsel %vm1221, 1.0, 0.0
    %v1322 = vsel %vm1222, 1.0, 0.0
    %v1323 = vsel %vm1223, 1.0, 0.0
    %v1324 = vsel %vm1224, 1.0, 0.0
    %v1325 = vsel %vm1225, 1.0, 0.0
    %v1326 = vsel %vm1226, 1.0, 0.0
    %v1327 = vsel %vm1227, 1.0, 0.0
    %v1328 = vsel %vm1228, 1.0, 0.0
    %v1329 = vsel %vm1229, 1.0, 0.0
    %v1330 = vsel %vm1230, 1.0, 0.0
    %v1331 = vsel %vm1231, 1.0, 0.0
    %v1332 = vsel %vm1232, 1.0, 0.0
    %v1333 = vsel %vm1233, 1.0, 0.0
    %v1334 = vsel %vm1234, 1.0, 0.0
    %v1335 = vsel %vm1235, 1.0, 0.0
    %v1336 = vsel %vm1236, 1.0, 0.0
    %v1337 = vsel %vm1237, 1.0, 0.0
    %v1338 = vsel %vm1238, 1.0, 0.0
    %v1339 = vsel %vm1239, 1.0, 0.0
    %v1340 = vsel %vm1240, 1.0, 0.0
    %v1341 = vsel %vm1241, 1.0, 0.0
    %v1342 = vsel %vm1242, 1.0, 0.0
    %v1343 = vsel %vm1243, 1.0, 0.0
    %v1344 = vsel %vm1244, 1.0, 0.0
    %v1345 = vsel %vm1245, 1.0, 0.0
    %v1346 = vsel %vm1246, 1.0, 0.0
    %v1347 = vsel %vm1247, 1.0, 0.0
    %v1348 = vsel %vm1248, 1.0, 0.0
    %v1349 = vsel %vm1249, 1.0, 0.0
    %v1350 = vsel %vm1250, 1.0, 0.0
    %v1351 = vsel %vm1251, 1.0, 0.0
    %v1352 = vsel %vm1252, 1.0, 0.0
    %v1353 = vsel %vm1253, 1.0, 0.0
    %v1354 = vsel %vm1254, 1.0, 0.0
    %v1355 = vsel %vm1255, 1.0, 0.0
    %v1356 = vsel %vm1256, 1.0, 0.0
    %v1357 = vsel %vm1257, 1.0, 0.0
    %v1358 = vsel %vm1258, 1.0, 0.0
    %v1359 = vsel %vm1259, 1.0, 0.0
    %v1360 = vsel %vm1260, 1.0, 0.0
    %v1361 = vsel %vm1261, 1.0, 0.0
    %v1362 = vsel %vm1262, 1.0, 0.0
    %v1363 = vsel %vm1263, 1.0, 0.0
    %v1364 = vsel %vm1264, 1.0, 0.0
    %v1365 = vsel %vm1265, 1.0, 0.0
    %v1366 = vsel %vm1266, 1.0, 0.0
    %v1367 = vsel %vm1267, 1.0, 0.0
    %v1368 = vsel %vm1268, 1.0, 0.0
    %v1369 = vsel %vm1269, 1.0, 0.0
    %v1370 = vsel %vm1270, 1.0, 0.0
    %v1371 = vsel %vm1271, 1.0, 0.0
    %v1372 = vsel %vm1272, 1.0, 0.0
    %v1373 = vsel %vm1273, 1.0, 0.0
    %v1374 = vsel %vm1274, 1.0, 0.0
    %v1375 = vsel %vm1275, 1.0, 0.0
    %vm1376 = vcmask 261120
    %v1378 = vsel %vm1376, %v1133, 0
    %1380 = vmatprep.subr.mxu0 %v1352
    %1381 = vmatpush1.msra.mxu0 %v1351
    %1382 = vmatprep.subr.mxu0 %v1347
    %1383 = vmatpush1.msra.mxu0 %v1346
    %1384 = vmatprep.subr.mxu0 %v1342
    %1385 = vmatpush1.msra.mxu0 %v1341
    %1386 = vmatprep.subr.mxu0 %v1337
    %1387 = vmatpush1.msra.mxu0 %v1336
    %1388 = vmatprep.subr.mxu0 %v1332
    %1389 = vmatpush1.msra.mxu0 %v1331
    %1390 = vmatprep.subr.mxu0 %v1327
    %1391 = vmatpush1.msra.mxu0 %v1326
    %1392 = vmatprep.subr.mxu0 %v1322
    %1393 = vmatpush1.msra.mxu0 %v1321
    %1394 = vmatprep.subr.mxu0 %v1317
    %1395 = vmatpush1.msra.mxu0 %v1316
    %1396 = vmatprep.subr.mxu0 %v1312
    %1397 = vmatpush1.msra.mxu0 %v1311
    %1398 = vmatprep.subr.mxu0 %v1307
    %1399 = vmatpush1.msra.mxu0 %v1306
    %1400 = vmatprep.subr.mxu0 %v1302
    %1401 = vmatpush1.msra.mxu0 %v1301
    %1402 = vmatprep.subr.mxu0 %v1297
    %1403 = vmatpush1.msra.mxu0 %v1296
    %1404 = vmatprep.subr.mxu0 %v1292
    %1405 = vmatpush1.msra.mxu0 %v1291
    %1406 = vmatprep.subr.mxu0 %v1287
    %1407 = vmatpush1.msra.mxu0 %v1286
    %1408 = vmatprep.subr.mxu0 %v1282
    %1409 = vmatpush1.msra.mxu0 %v1281
    %1410 = vmatprep.subr.mxu0 %v1277
    %1411 = vmatpush1.msra.mxu0 %v1276
    %1412 = vmatprep.subr.mxu0 0.0
    %1413 = vmatpush2.msra.mxu0 0.0
    %1414 = vmatprep.subr.mxu0 0.0
    %1415 = vmatpush2.msra.mxu0 0.0
    %1416 = vmatprep.subr.mxu0 0.0
    %1417 = vmatpush2.msra.mxu0 0.0
    %1418 = vmatprep.subr.mxu0 0.0
    %1419 = vmatpush2.msra.mxu0 0.0
    %1420 = vmatprep.subr.mxu0 0.0
    %1421 = vmatpush2.msra.mxu0 0.0
    %1422 = vmatprep.subr.mxu0 0.0
    %1423 = vmatpush2.msra.mxu0 0.0
    %1424 = vmatprep.subr.mxu0 0.0
    %1425 = vmatpush2.msra.mxu0 0.0
    %1426 = vmatprep.subr.mxu0 0.0
    %1427 = vmatpush2.msra.mxu0 0.0
    %1428 = vmatprep.subr.mxu0 0.0
    %1429 = vmatpush2.msra.mxu0 0.0
    %1430 = vmatprep.subr.mxu0 0.0
    %1431 = vmatpush2.msra.mxu0 0.0
    %1432 = vmatprep.subr.mxu0 0.0
    %1433 = vmatpush2.msra.mxu0 0.0
    %1434 = vmatprep.subr.mxu0 0.0
    %1435 = vmatpush2.msra.mxu0 0.0
    %1436 = vmatprep.subr.mxu0 %v1372
    %1437 = vmatpush2.msra.mxu0 %v1371
    %1438 = vmatprep.subr.mxu0 %v1367
    %1439 = vmatpush2.msra.mxu0 %v1366
    %1440 = vmatprep.subr.mxu0 %v1362
    %1441 = vmatpush2.msra.mxu0 %v1361
    %1442 = vmatprep.subr.mxu0 %v1357
    %1443 = vmatpush2.msra.mxu0 %v1356
    %1444 = vmatprep.mubr.f32.mxu0 %v1378
    %1445 = vmatmul.mubr.f32.gmra.mxu0 %v1132
    %v1446 = vpop.f32.mrf.mxu0
    %v1447 = vadd.f32 0.0, %v1446
    %v1448 = vpop.f32.mrf.mxu0
    %v1449 = vadd.f32 0.0, %v1448
    %1450 = vdwg.mxu0
    %1451 = vmatprep.subr.mxu0 %v1354
    %1452 = vmatpush1.msra.mxu0 %v1353
    %1453 = vmatprep.subr.mxu0 %v1349
    %1454 = vmatpush1.msra.mxu0 %v1348
    %1455 = vmatprep.subr.mxu0 %v1344
    %1456 = vmatpush1.msra.mxu0 %v1343
    %1457 = vmatprep.subr.mxu0 %v1339
    %1458 = vmatpush1.msra.mxu0 %v1338
    %1459 = vmatprep.subr.mxu0 %v1334
    %1460 = vmatpush1.msra.mxu0 %v1333
    %1461 = vmatprep.subr.mxu0 %v1329
    %1462 = vmatpush1.msra.mxu0 %v1328
    %1463 = vmatprep.subr.mxu0 %v1324
    %1464 = vmatpush1.msra.mxu0 %v1323
    %1465 = vmatprep.subr.mxu0 %v1319
    %1466 = vmatpush1.msra.mxu0 %v1318
    %1467 = vmatprep.subr.mxu0 %v1314
    %1468 = vmatpush1.msra.mxu0 %v1313
    %1469 = vmatprep.subr.mxu0 %v1309
    %1470 = vmatpush1.msra.mxu0 %v1308
    %1471 = vmatprep.subr.mxu0 %v1304
    %1472 = vmatpush1.msra.mxu0 %v1303
    %1473 = vmatprep.subr.mxu0 %v1299
    %1474 = vmatpush1.msra.mxu0 %v1298
    %1475 = vmatprep.subr.mxu0 %v1294
    %1476 = vmatpush1.msra.mxu0 %v1293
    %1477 = vmatprep.subr.mxu0 %v1289
    %1478 = vmatpush1.msra.mxu0 %v1288
    %1479 = vmatprep.subr.mxu0 %v1284
    %1480 = vmatpush1.msra.mxu0 %v1283
    %1481 = vmatprep.subr.mxu0 %v1279
    %1482 = vmatpush1.msra.mxu0 %v1278
    %1483 = vmatprep.subr.mxu0 0.0
    %1484 = vmatpush2.msra.mxu0 0.0
    %1485 = vmatprep.subr.mxu0 0.0
    %1486 = vmatpush2.msra.mxu0 0.0
    %1487 = vmatprep.subr.mxu0 0.0
    %1488 = vmatpush2.msra.mxu0 0.0
    %1489 = vmatprep.subr.mxu0 0.0
    %1490 = vmatpush2.msra.mxu0 0.0
    %1491 = vmatprep.subr.mxu0 0.0
    %1492 = vmatpush2.msra.mxu0 0.0
    %1493 = vmatprep.subr.mxu0 0.0
    %1494 = vmatpush2.msra.mxu0 0.0
    %1495 = vmatprep.subr.mxu0 0.0
    %1496 = vmatpush2.msra.mxu0 0.0
    %1497 = vmatprep.subr.mxu0 0.0
    %1498 = vmatpush2.msra.mxu0 0.0
    %1499 = vmatprep.subr.mxu0 0.0
    %1500 = vmatpush2.msra.mxu0 0.0
    %1501 = vmatprep.subr.mxu0 0.0
    %1502 = vmatpush2.msra.mxu0 0.0
    %1503 = vmatprep.subr.mxu0 0.0
    %1504 = vmatpush2.msra.mxu0 0.0
    %1505 = vmatprep.subr.mxu0 0.0
    %1506 = vmatpush2.msra.mxu0 0.0
    %1507 = vmatprep.subr.mxu0 %v1374
    %1508 = vmatpush2.msra.mxu0 %v1373
    %1509 = vmatprep.subr.mxu0 %v1369
    %1510 = vmatpush2.msra.mxu0 %v1368
    %1511 = vmatprep.subr.mxu0 %v1364
    %1512 = vmatpush2.msra.mxu0 %v1363
    %1513 = vmatprep.subr.mxu0 %v1359
    %1514 = vmatpush2.msra.mxu0 %v1358
    %1515 = vmatprep.mubr.f32.mxu0 %v1378
    %1516 = vmatmul.mubr.f32.gmra.mxu0 %v1132
    %v1517 = vpop.f32.mrf.mxu0
    %v1518 = vadd.f32 0.0, %v1517
    %v1519 = vpop.f32.mrf.mxu0
    %v1520 = vadd.f32 0.0, %v1519
    %1521 = vdwg.mxu0
    %1522 = vmatprep.subr.mxu0 0.0
    %1523 = vmatpush1.msra.mxu0 %v1355
    %1524 = vmatprep.subr.mxu0 0.0
    %1525 = vmatpush1.msra.mxu0 %v1350
    %1526 = vmatprep.subr.mxu0 0.0
    %1527 = vmatpush1.msra.mxu0 %v1345
    %1528 = vmatprep.subr.mxu0 0.0
    %1529 = vmatpush1.msra.mxu0 %v1340
    %1530 = vmatprep.subr.mxu0 0.0
    %1531 = vmatpush1.msra.mxu0 %v1335
    %1532 = vmatprep.subr.mxu0 0.0
    %1533 = vmatpush1.msra.mxu0 %v1330
    %1534 = vmatprep.subr.mxu0 0.0
    %1535 = vmatpush1.msra.mxu0 %v1325
    %1536 = vmatprep.subr.mxu0 0.0
    %1537 = vmatpush1.msra.mxu0 %v1320
    %1538 = vmatprep.subr.mxu0 0.0
    %1539 = vmatpush1.msra.mxu0 %v1315
    %1540 = vmatprep.subr.mxu0 0.0
    %1541 = vmatpush1.msra.mxu0 %v1310
    %1542 = vmatprep.subr.mxu0 0.0
    %1543 = vmatpush1.msra.mxu0 %v1305
    %1544 = vmatprep.subr.mxu0 0.0
    %1545 = vmatpush1.msra.mxu0 %v1300
    %1546 = vmatprep.subr.mxu0 0.0
    %1547 = vmatpush1.msra.mxu0 %v1295
    %1548 = vmatprep.subr.mxu0 0.0
    %1549 = vmatpush1.msra.mxu0 %v1290
    %1550 = vmatprep.subr.mxu0 0.0
    %1551 = vmatpush1.msra.mxu0 %v1285
    %1552 = vmatprep.subr.mxu0 0.0
    %1553 = vmatpush1.msra.mxu0 %v1280
    %1554 = vmatprep.subr.mxu0 0.0
    %1555 = vmatpush2.msra.mxu0 0.0
    %1556 = vmatprep.subr.mxu0 0.0
    %1557 = vmatpush2.msra.mxu0 0.0
    %1558 = vmatprep.subr.mxu0 0.0
    %1559 = vmatpush2.msra.mxu0 0.0
    %1560 = vmatprep.subr.mxu0 0.0
    %1561 = vmatpush2.msra.mxu0 0.0
    %1562 = vmatprep.subr.mxu0 0.0
    %1563 = vmatpush2.msra.mxu0 0.0
    %1564 = vmatprep.subr.mxu0 0.0
    %1565 = vmatpush2.msra.mxu0 0.0
    %1566 = vmatprep.subr.mxu0 0.0
    %1567 = vmatpush2.msra.mxu0 0.0
    %1568 = vmatprep.subr.mxu0 0.0
    %1569 = vmatpush2.msra.mxu0 0.0
    %1570 = vmatprep.subr.mxu0 0.0
    %1571 = vmatpush2.msra.mxu0 0.0
    %1572 = vmatprep.subr.mxu0 0.0
    %1573 = vmatpush2.msra.mxu0 0.0
    %1574 = vmatprep.subr.mxu0 0.0
    %1575 = vmatpush2.msra.mxu0 0.0
    %1576 = vmatprep.subr.mxu0 0.0
    %1577 = vmatpush2.msra.mxu0 0.0
    %1578 = vmatprep.subr.mxu0 0.0
    %1579 = vmatpush2.msra.mxu0 %v1375
    %1580 = vmatprep.subr.mxu0 0.0
    %1581 = vmatpush2.msra.mxu0 %v1370
    %1582 = vmatprep.subr.mxu0 0.0
    %1583 = vmatpush2.msra.mxu0 %v1365
    %1584 = vmatprep.subr.mxu0 0.0
    %1585 = vmatpush2.msra.mxu0 %v1360
    %1586 = vmatprep.mubr.f32.mxu0 %v1378
    %1587 = vmatmul.mubr.f32.gmra.mxu0 %v1132
    %v1588 = vpop.f32.mrf.mxu0
    %v1589 = vadd.f32 0.0, %v1588
    %v1590 = vpop.f32.mrf.mxu0
    %1591 = vdwg.mxu0
    %v1592 = vadd.f32 %v855, %v1447
    %v1593 = vadd.f32 %v856, %v1449
    %v1594 = vadd.f32 %v857, %v1518
    %v1595 = vadd.f32 %v858, %v1520
    %v1596 = vadd.f32 %v859, %v1589
    %v1597 = vld [vmem:[%s5] sm:$0x1f]
    %v1599 = vlaneseq
    %v1600 = vshrl.u32 %v1599, 7
    %v1601 = vsub.s32 0, %v1600
    %v1602 = vrot.slane %v1597, %v1601
    %v1603 = vlaneseq
    %v1604 = vshrl.u32 %v1603, 7
    %v1605 = vsub.s32 1, %v1604
    %v1606 = vrot.slane %v1597, %v1605
    %v1607 = vlaneseq
    %v1608 = vshrl.u32 %v1607, 7
    %v1609 = vsub.s32 2, %v1608
    %v1610 = vrot.slane %v1597, %v1609
    %v1611 = vlaneseq
    %v1612 = vshrl.u32 %v1611, 7
    %v1613 = vsub.s32 3, %v1612
    %v1614 = vrot.slane %v1597, %v1613
    %v1615 = vlaneseq
    %v1616 = vshrl.u32 %v1615, 7
    %v1617 = vsub.s32 4, %v1616
    %v1618 = vrot.slane %v1597, %v1617
    %v1624 = vmul.f32 %v1592, %v1602
    %v1625 = vmul.f32 %v1593, %v1606
    %v1626 = vmul.f32 %v1594, %v1610
    %v1627 = vmul.f32 %v1595, %v1614
    %v1628 = vmul.f32 %v1596, %v1618
    %v1629 = vadd.f32 %v1624, %v1625
    %v1630 = vadd.f32 %v1629, %v1626
    %v1631 = vadd.f32 %v1630, %v1627
    %vm1632 = vcmask 523264
    %v1633 = vsel %vm1632, %v1628, 0.0
    %v1634 = vadd.f32 %v1631, %v1633
    %1635 = vadd.xlane.f32.xlu0 %v1634
    %v1636 = vpop.xlane.xlu0 %1635
    %v1637 = vmul.f32 %v1624, %v1592
    %v1638 = vmul.f32 %v1625, %v1593
    %v1639 = vmul.f32 %v1626, %v1594
    %v1640 = vmul.f32 %v1627, %v1595
    %v1641 = vmul.f32 %v1628, %v1596
    %v1642 = vadd.f32 %v1637, %v1638
    %v1643 = vadd.f32 %v1642, %v1639
    %v1644 = vadd.f32 %v1643, %v1640
    %v1645 = vsel %vm1632, %v1641, 0.0
    %v1646 = vadd.f32 %v1644, %v1645
    %1647 = vadd.xlane.f32.xlu0 %v1646
    %v1648 = vpop.xlane.xlu0 %1647
    %v1649 = vmul.f32 %v1636, 0.001953125
    %v1650 = vmul.f32 %v1648, 0.001953125
    %v1651 = vmul.f32 %v1649, %v1649
    %v1652 = vsub.f32 %v1650, %v1651
    %v1653 = vld [vmem:[%s6] sm:$0xff]
    %v1654 = vadd.f32 %v1652, 1e-05
    %v1655 = vrsqrt.pop %v1654
    %v1656 = vmul.f32 %v1653, %v1655
    %v1657 = vld [vmem:[%s7] sm:$0xff]
    %v1658 = vmul.f32 %v1649, %v1656
    %v1659 = vsub.f32 %v1657, %v1658
    %1661 = vset.pattern.permute.xlu0 0
    %1662 = vperm.xlu0 %1661, %v1656
    %v1663 = vpop.permute.xlu0 %1662
    %v1665 = vmul.f32 %v1592, %v1663
    %v1666 = vmul.f32 %v1593, %v1663
    %v1667 = vmul.f32 %v1594, %v1663
    %v1668 = vmul.f32 %v1595, %v1663
    %v1669 = vmul.f32 %v1596, %v1663
    %1671 = vset.pattern.permute.xlu0 0
    %1672 = vperm.xlu0 %1671, %v1659
    %v1673 = vpop.permute.xlu0 %1672
    %v1675 = vadd.f32 %v1665, %v1673
    %v1676 = vadd.f32 %v1666, %v1673
    %v1677 = vadd.f32 %v1667, %v1673
    %v1678 = vadd.f32 %v1668, %v1673
    %v1679 = vadd.f32 %v1669, %v1673
    %1680 = vst [vmem:[#allocation10] sm:$0xff] %v1675
    %1681 = vst [vmem:[#allocation10 + $0x8] sm:$0xff] %v1676
    %1685 = vrot.lane.b32.xlu0 %v1677, 96
    %v1686 = vpop.permute.xlu0 %1685
    %1687 = vrot.lane.b32.xlu0 %v1678, 96
    %v1688 = vpop.permute.xlu0 %1687
    %1689 = vrot.lane.b32.xlu0 %v1679, 96
    %v1690 = vpop.permute.xlu0 %1689
    %v1691 = vsel %vm616, %v1686, %v1688
    %v1692 = vsel %vm616, %v1688, %v1690
    %s1695 = scalar_lea.vmem [#allocation10], 16
    %1696 = vst [vmem:[%s1695] sm:$0xff] %v1691
    %1697 = vst [vmem:[%s1695 + $0x8] sm:$0xff] %v1692
    // Predicated region
    $region50: #{tpu_custom_call.1} parent=1 // pred_check
      _
    $region51: #{tpu_custom_call.1} parent=1 // pred_check_branch
      %1699 = sbr.rel (0) target = $region53
    $region52: #{tpu_custom_call.1} parent=1 // pred_region
      %s1701 = ssub.s32 512, 512
      %1702 = vsyncadd [#allocation4], %s1701
      %s1703 = sshll.u32 [#allocation10], 4
      %s1704 = int_to_ptr.vmem [resolvable:$true] %s1703
      %1709 = dma.vmem_to_hbm [thread:$0]  %s1704, 512, %s8, [#allocation4], 256, 256, 16
    $region53: #{tpu_custom_call.1} parent=1 // pred_fallthru
      _
    // Predicated region
    $region54: #{tpu_custom_call.1} parent=1 // pred_check
      _
    $region55: #{tpu_custom_call.1} parent=1 // pred_check_branch
      %1711 = sbr.rel (0) target = $region57
    $region56: #{tpu_custom_call.1} parent=1 // pred_region
      %1712 = dma.done [#allocation4], 512
    $region57: #{tpu_custom_call.1} parent=1 // pred_fallthru
      _
    %1713 = vsyncpa [#allocation3], 1
    %1714 = vsyncpa [#allocation6], 1
    %1715 = vsyncpa [#allocation9], 1
    %1716 = vsyncpa [#allocation4], 1

</llo_original>
